<compile_context>
chip_gen: v5e
topology: v5e:2x2
jax: 0.10.0
libtpu: 0.0.40
codegen_flags: <defaults>
</compile_context>

<pallas_src>
import functools

import jax
import jax.numpy as jnp
from jax.experimental import pallas as pl
from jax.experimental.pallas import tpu as pltpu

ATT_DIM = 256
N_CLASSES = 5
SCALE = ATT_DIM ** (-0.5)


def _attn_pool_head_kernel(x_ref, wt_ref, vs_ref, lwt_ref, lb_ref, out_ref,
                           m_acc, l_acc, f_acc, *, bb, t_total):
    """Grid = (batch blocks, T tiles). One batch block x one T tile per step.

    x_ref  : (bb, 256, Tt)  BaseNet features, channel-major (no host transpose)
    wt_ref : (256, 256)     attention W, pre-transposed, bf16 (MXU operand)
    vs_ref : (256, 1)       attention V * att_dim**-0.5  (scale folded in), f32
    lwt_ref: (256, 5)       linear weight, pre-transposed, f32
    lb_ref : (1, 5)         linear bias, f32
    out_ref: (bb, 1, 5)     logits for this batch block
    m_acc  : (bb, 1)        online-softmax running max        (VMEM scratch, f32)
    l_acc  : (bb, 1)        online-softmax running sum(exp)   (VMEM scratch, f32)
    f_acc  : (bb, 256, 1)   running exp-weighted feature sum  (VMEM scratch, f32)
    """
    t_idx = pl.program_id(1)
    num_t = pl.num_programs(1)
    t_tile = x_ref.shape[-1]

    @pl.when(t_idx == 0)
    def _():
        m_acc[...] = jnp.full(m_acc.shape, -jnp.inf, dtype=m_acc.dtype)
        l_acc[...] = jnp.zeros(l_acc.shape, dtype=l_acc.dtype)
        f_acc[...] = jnp.zeros(f_acc.shape, dtype=f_acc.dtype)

    # Ragged last T tile: mask padded columns (scores -> -inf, features -> 0).
    needs_mask = (t_total % t_tile) != 0
    if needs_mask:
        col = jax.lax.broadcasted_iota(jnp.int32, (1, t_tile), 1) + t_idx * t_tile
        valid = col < t_total                                            # (1, Tt) bool

    # Hoist weight loads out of the unrolled batch loop.
    wt = wt_ref[...]                                                     # (256, 256) bf16
    vs = vs_ref[...]                                                     # (256, 1)   f32

    for i in range(bb):                       # static unroll over the batch block
        xb = x_ref[i]                                                    # (256, Tt)
        if needs_mask:
            xb = jnp.where(valid, xb, 0.0)

        # e^T = W^T @ x_b : the single MXU matmul, bf16 operands, f32 accumulation.
        et = jnp.tanh(jnp.dot(wt, xb.astype(jnp.bfloat16),
                              preferred_element_type=jnp.float32))       # (256, Tt) f32

        # attention scores: VPU multiply + sublane reduce (avoids an N=1 MXU pass)
        s = jnp.sum(et * vs, axis=0, keepdims=True)                      # (1, Tt)
        if needs_mask:
            s = jnp.where(valid, s, -jnp.inf)

        # online softmax update for this tile
        m_old = m_acc[pl.ds(i, 1)]                                       # (1, 1)
        m_new = jnp.maximum(m_old, jnp.max(s, axis=-1, keepdims=True))   # (1, 1)
        corr = jnp.exp(m_old - m_new)                                    # (1, 1)
        p = jnp.exp(s - m_new)                                           # (1, Tt)
        if needs_mask:
            p = jnp.where(valid, p, 0.0)

        pooled = jnp.sum(xb.astype(jnp.float32) * p, axis=-1,
                         keepdims=True)                                  # (256, 1)

        l_acc[pl.ds(i, 1)] = corr * l_acc[pl.ds(i, 1)] + jnp.sum(p, axis=-1, keepdims=True)
        f_acc[pl.ds(i, 1)] = corr * f_acc[pl.ds(i, 1)] + pooled[None]    # (1, 256, 1)
        m_acc[pl.ds(i, 1)] = m_new

    @pl.when(t_idx == num_t - 1)
    def _():
        lwt = lwt_ref[...]                                               # (256, 5)
        lb = lb_ref[...]                                                 # (1, 5)
        for i in range(bb):
            # single approximate reciprocal (EUP slot) instead of a T-length divide
            inv_l = pl.reciprocal(l_acc[pl.ds(i, 1)], approx=True)       # (1, 1)
            feats = f_acc[pl.ds(i, 1)][0] * inv_l                        # (256, 1)
            # 5-class head: VPU multiply + sublane reduce (N=5 << 128 lanes)
            logits = jnp.sum(feats * lwt, axis=0, keepdims=True) + lb    # (1, 5)
            out_ref[i] = logits


def _largest_divisor_leq(n, cap):
    for d in range(max(1, min(n, cap)), 0, -1):
        if n % d == 0:
            return d
    return 1


def predict_model_forward(time_feats_bct, att_W, att_V, lin_W, lin_b,
                          *, t_tile=None, batch_block=None):
    """time_feats_bct: (B, 256, T) BaseNet output in PyTorch NCT layout (NOT transposed)."""
    B, C, T = time_feats_bct.shape
    assert C == ATT_DIM

    # T tiling: full T when small; otherwise 2048-wide tiles (multiple of 256 -> MXU-friendly,
    # bounded VMEM on v7x). Ragged last tile is masked inside the kernel.
    if t_tile is None:
        t_tile = T if T <= 2048 else 2048
    assert t_tile == T or t_tile % 128 == 0, "t_tile must be full T or a multiple of 128"
    num_t = pl.cdiv(T, t_tile)

    # Batch blocking: amortize per-grid-step overhead at small T while keeping the
    # (double-buffered) x block <= ~4 MiB and the static unroll short.
    if batch_block is None:
        itemsize = time_feats_bct.dtype.itemsize
        cap = max(1, min(16, (4 * 1024 * 1024) // (C * t_tile * itemsize)))
        batch_block = _largest_divisor_leq(B, cap)
    bb = batch_block
    assert B % bb == 0

    # Tiny one-time parameter preps; the big activation tensor is never transposed host-side.
    wt = jnp.transpose(att_W).astype(jnp.bfloat16)                       # (256, 256) bf16 MXU operand
    vs = (att_V * SCALE).astype(jnp.float32).reshape(C, 1)               # (256, 1)
    lwt = jnp.transpose(lin_W).astype(jnp.float32)                       # (256, 5)
    lb2 = lin_b.reshape(1, N_CLASSES).astype(jnp.float32)                # (1, 5)

    kernel = functools.partial(_attn_pool_head_kernel, bb=bb, t_total=T)

    out = pl.pallas_call(
        kernel,
        out_shape=jax.ShapeDtypeStruct((B, 1, N_CLASSES), jnp.float32),
        grid=(B // bb, num_t),
        in_specs=[
            pl.BlockSpec((bb, C, t_tile), lambda b, t: (b, 0, t)),       # x: batch-block x T-tile
            pl.BlockSpec((C, C), lambda b, t: (0, 0)),                   # W^T : resident
            pl.BlockSpec((C, 1), lambda b, t: (0, 0)),                   # V*scale : resident
            pl.BlockSpec((C, N_CLASSES), lambda b, t: (0, 0)),           # lin W^T : resident
            pl.BlockSpec((1, N_CLASSES), lambda b, t: (0, 0)),           # lin b : resident
        ],
        out_specs=pl.BlockSpec((bb, 1, N_CLASSES), lambda b, t: (b, 0, 0)),
        scratch_shapes=[
            pltpu.VMEM((bb, 1), jnp.float32),                            # m (running max)
            pltpu.VMEM((bb, 1), jnp.float32),                            # l (running sum exp)
            pltpu.VMEM((bb, C, 1), jnp.float32),                         # feature accumulator
        ],
        compiler_params=pltpu.CompilerParams(
            dimension_semantics=("parallel", "arbitrary"),               # megacore split on v7x
            vmem_limit_bytes=32 * 1024 * 1024,
        ),
    )(time_feats_bct, wt, vs, lwt, lb2)
    return out.reshape(B, N_CLASSES)


def _reference(time_feats_bct, att_W, att_V, lin_W, lin_b, matmul_dtype=jnp.float32):
    """Pure-JAX replica of the PyTorch forward. matmul_dtype=bf16 emulates the kernel's MXU path."""
    x = jnp.transpose(time_feats_bct, (0, 2, 1)).astype(jnp.float32)     # (B, T, 256)
    e = jnp.einsum("btc,cd->btd", x.astype(matmul_dtype), att_W.astype(matmul_dtype),
                   preferred_element_type=jnp.float32)
    e = jnp.einsum("btd,do->bto", jnp.tanh(e), att_V.astype(jnp.float32)) * SCALE
    n1 = jnp.exp(e)
    n2 = jnp.sum(n1, axis=1, keepdims=True)
    alpha = n1 / n2
    feats = jnp.sum(alpha * x, axis=1)                                   # (B, 256)
    return feats @ lin_W.T + lin_b                                       # (B, 5)


if __name__ == "__main__":
    key = jax.random.PRNGKey(0)
    k_x, k_w, k_v, k_lw, k_lb, k_x2 = jax.random.split(key, 6)

    B, T = 2, 8
    # BaseNet output stand-in: (B, 256, T) time features, channel-major
    time_feats = jax.random.normal(k_x, (B, ATT_DIM, T), dtype=jnp.float32)

    # attention params: torch.randn(256, 256) / torch.randn(256, 1)
    att_W = jax.random.normal(k_w, (ATT_DIM, ATT_DIM), dtype=jnp.float32)
    att_V = jax.random.normal(k_v, (ATT_DIM, 1), dtype=jnp.float32)
    # nn.Linear(256, 5): weight (5, 256), bias (5,)
    bound = 1.0 / (ATT_DIM ** 0.5)
    lin_W = jax.random.uniform(k_lw, (N_CLASSES, ATT_DIM), minval=-bound, maxval=bound,
                               dtype=jnp.float32)
    lin_b = jax.random.uniform(k_lb, (N_CLASSES,), minval=-bound, maxval=bound,
                               dtype=jnp.float32)

    out = jax.block_until_ready(predict_model_forward(time_feats, att_W, att_V, lin_W, lin_b))
    assert out.shape == (B, N_CLASSES)

    # Tight check vs. a reference that emulates the kernel's bf16 MXU path.
    ref_bf16 = _reference(time_feats, att_W, att_V, lin_W, lin_b, matmul_dtype=jnp.bfloat16)
    assert jnp.allclose(out, ref_bf16, atol=5e-3, rtol=5e-3), "mismatch vs bf16-matmul reference"
    # Looser check vs. the full-f32 PyTorch-equivalent reference (bf16 MXU deviation).
    ref_f32 = _reference(time_feats, att_W, att_V, lin_W, lin_b)
    assert jnp.allclose(out, ref_f32, atol=5e-2, rtol=5e-2), "mismatch vs f32 reference"

    # Also exercise the T-tiled online-softmax path with a ragged (masked) last tile.
    B2, T2 = 3, 200
    time_feats2 = jax.random.normal(k_x2, (B2, ATT_DIM, T2), dtype=jnp.float32)
    out2 = jax.block_until_ready(
        predict_model_forward(time_feats2, att_W, att_V, lin_W, lin_b, t_tile=128))
    ref2 = _reference(time_feats2, att_W, att_V, lin_W, lin_b, matmul_dtype=jnp.bfloat16)
    assert jnp.allclose(out2, ref2, atol=5e-3, rtol=5e-3), "mismatch on tiled/masked path"

    print("KERNEL_OK")
</pallas_src>

<mosaic_0001>
module attributes {stable_mosaic.version = 11 : i64} {
  func.func @_attn_pool_head_kernel(%arg0: i32, %arg1: i32, %arg2: memref<2x256x8xf32, #tpu.memory_space<vmem>>, %arg3: memref<256x256xbf16, #tpu.memory_space<vmem>>, %arg4: memref<256x1xf32, #tpu.memory_space<vmem>>, %arg5: memref<256x5xf32, #tpu.memory_space<vmem>>, %arg6: memref<1x5xf32, #tpu.memory_space<vmem>>, %arg7: memref<2x1x5xf32, #tpu.memory_space<vmem>>, %arg8: memref<2x1xf32, #tpu.memory_space<vmem>>, %arg9: memref<2x1xf32, #tpu.memory_space<vmem>>, %arg10: memref<2x256x1xf32, #tpu.memory_space<vmem>>) attributes {dimension_semantics = [#tpu.dimension_semantics<parallel>, #tpu.dimension_semantics<arbitrary>], iteration_bounds = array<i64: 1, 1>, scalar_prefetch = 0 : i64, scratch_operands = 3 : i64, tpu.core_type = #tpu.core_type<tc>, window_params = [{transform_indices = @transform_0, window_bounds = array<i64: 2, 256, 8>}, {pipeline_mode = #tpu.pipeline_mode<synchronous>, transform_indices = @transform_1, window_bounds = array<i64: 256, 256>}, {pipeline_mode = #tpu.pipeline_mode<synchronous>, transform_indices = @transform_2, window_bounds = array<i64: 256, 1>}, {pipeline_mode = #tpu.pipeline_mode<synchronous>, transform_indices = @transform_3, window_bounds = array<i64: 256, 5>}, {pipeline_mode = #tpu.pipeline_mode<synchronous>, transform_indices = @transform_4, window_bounds = array<i64: 1, 5>}, {transform_indices = @transform_5, window_bounds = array<i64: 2, 1, 5>}]} {
    %c0_i32 = arith.constant 0 : i32
    %0 = arith.cmpi eq, %arg1, %c0_i32 : i32
    %1 = arith.extui %0 : i1 to i32
    %c0_i32_0 = arith.constant 0 : i32
    %2 = arith.cmpi ne, %1, %c0_i32_0 : i32
    scf.if %2 {
      %cst_48 = arith.constant 0xFF800000 : f32
      %80 = vector.broadcast %cst_48 : f32 to vector<2x1xf32>
      %c0_49 = arith.constant 0 : index
      %c0_50 = arith.constant 0 : index
      %81 = vector.load %arg8[%c0_49, %c0_50] : memref<2x1xf32, #tpu.memory_space<vmem>>, vector<2x1xf32>
      tpu.vector_store %arg8[%c0_49, %c0_50], %80 {strides = array<i32>} : memref<2x1xf32, #tpu.memory_space<vmem>>, vector<2x1xf32>,
      %cst_51 = arith.constant 0.000000e+00 : f32
      %82 = vector.broadcast %cst_51 : f32 to vector<2x1xf32>
      %c0_52 = arith.constant 0 : index
      %c0_53 = arith.constant 0 : index
      %83 = vector.load %arg9[%c0_52, %c0_53] : memref<2x1xf32, #tpu.memory_space<vmem>>, vector<2x1xf32>
      tpu.vector_store %arg9[%c0_52, %c0_53], %82 {strides = array<i32>} : memref<2x1xf32, #tpu.memory_space<vmem>>, vector<2x1xf32>,
      %cst_54 = arith.constant 0.000000e+00 : f32
      %84 = vector.broadcast %cst_54 : f32 to vector<2x256x1xf32>
      %c0_55 = arith.constant 0 : index
      %c0_56 = arith.constant 0 : index
      %c0_57 = arith.constant 0 : index
      %85 = vector.load %arg10[%c0_55, %c0_56, %c0_57] : memref<2x256x1xf32, #tpu.memory_space<vmem>>, vector<2x256x1xf32>
      tpu.vector_store %arg10[%c0_55, %c0_56, %c0_57], %84 {strides = array<i32>} : memref<2x256x1xf32, #tpu.memory_space<vmem>>, vector<2x256x1xf32>,
    } else {
    }
    %c0 = arith.constant 0 : index
    %c0_1 = arith.constant 0 : index
    %3 = vector.load %arg3[%c0, %c0_1] : memref<256x256xbf16, #tpu.memory_space<vmem>>, vector<256x256xbf16>
    %c0_2 = arith.constant 0 : index
    %c0_3 = arith.constant 0 : index
    %4 = vector.load %arg4[%c0_2, %c0_3] : memref<256x1xf32, #tpu.memory_space<vmem>>, vector<256x1xf32>
    %c0_4 = arith.constant 0 : index
    %c0_5 = arith.constant 0 : index
    %c0_6 = arith.constant 0 : index
    %5 = vector.load %arg2[%c0_4, %c0_5, %c0_6] : memref<2x256x8xf32, #tpu.memory_space<vmem>>, vector<1x256x8xf32>
    %6 = vector.shape_cast %5 : vector<1x256x8xf32> to vector<256x8xf32>
    %7 = arith.truncf %6 : vector<256x8xf32> to vector<256x8xbf16>
    %cst = arith.constant dense<0.000000e+00> : vector<256x8xf32>
    %8 = tpu.matmul %3, %7, %cst {dimension_numbers = #tpu.dot_dimension_numbers<[1], [0], [0], [1], [0, 0, 1, 1], [], []>} : vector<256x256xbf16>, vector<256x8xbf16>, vector<256x8xf32> -> vector<256x8xf32>
    %9 = math.tanh %8 : vector<256x8xf32>
    %10 = vector.broadcast %4 : vector<256x1xf32> to vector<256x8xf32>
    %11 = arith.mulf %9, %10 : vector<256x8xf32>
    %cst_7 = arith.constant dense<0.000000e+00> : vector<8xf32>
    %12 = vector.multi_reduction <add>, %11, %cst_7 [0] : vector<256x8xf32> to vector<8xf32>
    %13 = vector.shape_cast %12 : vector<8xf32> to vector<1x8xf32>
    %c0_8 = arith.constant 0 : index
    %c0_9 = arith.constant 0 : index
    %14 = vector.load %arg8[%c0_8, %c0_9] : memref<2x1xf32, #tpu.memory_space<vmem>>, vector<1x1xf32>
    %cst_10 = arith.constant dense<0xFF800000> : vector<1xf32>
    %15 = vector.multi_reduction <maximumf>, %13, %cst_10 [1] : vector<1x8xf32> to vector<1xf32>
    %16 = vector.shape_cast %15 : vector<1xf32> to vector<1x1xf32>
    %17 = arith.maximumf %14, %16 : vector<1x1xf32>
    %18 = arith.subf %14, %17 : vector<1x1xf32>
    %19 = math.exp %18 : vector<1x1xf32>
    %20 = vector.broadcast %17 : vector<1x1xf32> to vector<1x8xf32>
    %21 = arith.subf %13, %20 : vector<1x8xf32>
    %22 = math.exp %21 : vector<1x8xf32>
    %23 = vector.broadcast %22 : vector<1x8xf32> to vector<256x8xf32>
    %24 = arith.mulf %6, %23 : vector<256x8xf32>
    %cst_11 = arith.constant dense<0.000000e+00> : vector<256xf32>
    %25 = vector.multi_reduction <add>, %24, %cst_11 [1] : vector<256x8xf32> to vector<256xf32>
    %26 = vector.shape_cast %25 : vector<256xf32> to vector<256x1xf32>
    %c0_12 = arith.constant 0 : index
    %c0_13 = arith.constant 0 : index
    %27 = vector.load %arg9[%c0_12, %c0_13] : memref<2x1xf32, #tpu.memory_space<vmem>>, vector<1x1xf32>
    %28 = arith.mulf %19, %27 : vector<1x1xf32>
    %cst_14 = arith.constant dense<0.000000e+00> : vector<1xf32>
    %29 = vector.multi_reduction <add>, %22, %cst_14 [1] : vector<1x8xf32> to vector<1xf32>
    %30 = vector.shape_cast %29 : vector<1xf32> to vector<1x1xf32>
    %31 = arith.addf %28, %30 : vector<1x1xf32>
    %c0_15 = arith.constant 0 : index
    %c0_16 = arith.constant 0 : index
    %32 = vector.load %arg9[%c0_15, %c0_16] : memref<2x1xf32, #tpu.memory_space<vmem>>, vector<1x1xf32>
    tpu.vector_store %arg9[%c0_15, %c0_16], %31 {strides = array<i32>} : memref<2x1xf32, #tpu.memory_space<vmem>>, vector<1x1xf32>,
    %c0_17 = arith.constant 0 : index
    %c0_18 = arith.constant 0 : index
    %c0_19 = arith.constant 0 : index
    %33 = vector.load %arg10[%c0_17, %c0_18, %c0_19] : memref<2x256x1xf32, #tpu.memory_space<vmem>>, vector<1x256x1xf32>
    %34 = vector.shape_cast %19 : vector<1x1xf32> to vector<1x1x1xf32>
    %35 = vector.broadcast %34 : vector<1x1x1xf32> to vector<1x256x1xf32>
    %36 = arith.mulf %35, %33 : vector<1x256x1xf32>
    %37 = vector.shape_cast %26 : vector<256x1xf32> to vector<1x256x1xf32>
    %38 = arith.addf %36, %37 : vector<1x256x1xf32>
    %c0_20 = arith.constant 0 : index
    %c0_21 = arith.constant 0 : index
    %c0_22 = arith.constant 0 : index
    %39 = vector.load %arg10[%c0_20, %c0_21, %c0_22] : memref<2x256x1xf32, #tpu.memory_space<vmem>>, vector<1x256x1xf32>
    tpu.vector_store %arg10[%c0_20, %c0_21, %c0_22], %38 {strides = array<i32>} : memref<2x256x1xf32, #tpu.memory_space<vmem>>, vector<1x256x1xf32>,
    %c0_23 = arith.constant 0 : index
    %c0_24 = arith.constant 0 : index
    %40 = vector.load %arg8[%c0_23, %c0_24] : memref<2x1xf32, #tpu.memory_space<vmem>>, vector<1x1xf32>
    tpu.vector_store %arg8[%c0_23, %c0_24], %17 {strides = array<i32>} : memref<2x1xf32, #tpu.memory_space<vmem>>, vector<1x1xf32>,
    %c1 = arith.constant 1 : index
    %c0_25 = arith.constant 0 : index
    %c0_26 = arith.constant 0 : index
    %41 = vector.load %arg2[%c1, %c0_25, %c0_26] : memref<2x256x8xf32, #tpu.memory_space<vmem>>, vector<1x256x8xf32>
    %42 = vector.shape_cast %41 : vector<1x256x8xf32> to vector<256x8xf32>
    %43 = arith.truncf %42 : vector<256x8xf32> to vector<256x8xbf16>
    %cst_27 = arith.constant dense<0.000000e+00> : vector<256x8xf32>
    %44 = tpu.matmul %3, %43, %cst_27 {dimension_numbers = #tpu.dot_dimension_numbers<[1], [0], [0], [1], [0, 0, 1, 1], [], []>} : vector<256x256xbf16>, vector<256x8xbf16>, vector<256x8xf32> -> vector<256x8xf32>
    %45 = math.tanh %44 : vector<256x8xf32>
    %46 = vector.broadcast %4 : vector<256x1xf32> to vector<256x8xf32>
    %47 = arith.mulf %45, %46 : vector<256x8xf32>
    %cst_28 = arith.constant dense<0.000000e+00> : vector<8xf32>
    %48 = vector.multi_reduction <add>, %47, %cst_28 [0] : vector<256x8xf32> to vector<8xf32>
    %49 = vector.shape_cast %48 : vector<8xf32> to vector<1x8xf32>
    %c1_29 = arith.constant 1 : index
    %c0_30 = arith.constant 0 : index
    %50 = vector.load %arg8[%c1_29, %c0_30] : memref<2x1xf32, #tpu.memory_space<vmem>>, vector<1x1xf32>
    %cst_31 = arith.constant dense<0xFF800000> : vector<1xf32>
    %51 = vector.multi_reduction <maximumf>, %49, %cst_31 [1] : vector<1x8xf32> to vector<1xf32>
    %52 = vector.shape_cast %51 : vector<1xf32> to vector<1x1xf32>
    %53 = arith.maximumf %50, %52 : vector<1x1xf32>
    %54 = arith.subf %50, %53 : vector<1x1xf32>
    %55 = math.exp %54 : vector<1x1xf32>
    %56 = vector.broadcast %53 : vector<1x1xf32> to vector<1x8xf32>
    %57 = arith.subf %49, %56 : vector<1x8xf32>
    %58 = math.exp %57 : vector<1x8xf32>
    %59 = vector.broadcast %58 : vector<1x8xf32> to vector<256x8xf32>
    %60 = arith.mulf %42, %59 : vector<256x8xf32>
    %cst_32 = arith.constant dense<0.000000e+00> : vector<256xf32>
    %61 = vector.multi_reduction <add>, %60, %cst_32 [1] : vector<256x8xf32> to vector<256xf32>
    %62 = vector.shape_cast %61 : vector<256xf32> to vector<256x1xf32>
    %c1_33 = arith.constant 1 : index
    %c0_34 = arith.constant 0 : index
    %63 = vector.load %arg9[%c1_33, %c0_34] : memref<2x1xf32, #tpu.memory_space<vmem>>, vector<1x1xf32>
    %64 = arith.mulf %55, %63 : vector<1x1xf32>
    %cst_35 = arith.constant dense<0.000000e+00> : vector<1xf32>
    %65 = vector.multi_reduction <add>, %58, %cst_35 [1] : vector<1x8xf32> to vector<1xf32>
    %66 = vector.shape_cast %65 : vector<1xf32> to vector<1x1xf32>
    %67 = arith.addf %64, %66 : vector<1x1xf32>
    %c1_36 = arith.constant 1 : index
    %c0_37 = arith.constant 0 : index
    %68 = vector.load %arg9[%c1_36, %c0_37] : memref<2x1xf32, #tpu.memory_space<vmem>>, vector<1x1xf32>
    tpu.vector_store %arg9[%c1_36, %c0_37], %67 {strides = array<i32>} : memref<2x1xf32, #tpu.memory_space<vmem>>, vector<1x1xf32>,
    %c1_38 = arith.constant 1 : index
    %c0_39 = arith.constant 0 : index
    %c0_40 = arith.constant 0 : index
    %69 = vector.load %arg10[%c1_38, %c0_39, %c0_40] : memref<2x256x1xf32, #tpu.memory_space<vmem>>, vector<1x256x1xf32>
    %70 = vector.shape_cast %55 : vector<1x1xf32> to vector<1x1x1xf32>
    %71 = vector.broadcast %70 : vector<1x1x1xf32> to vector<1x256x1xf32>
    %72 = arith.mulf %71, %69 : vector<1x256x1xf32>
    %73 = vector.shape_cast %62 : vector<256x1xf32> to vector<1x256x1xf32>
    %74 = arith.addf %72, %73 : vector<1x256x1xf32>
    %c1_41 = arith.constant 1 : index
    %c0_42 = arith.constant 0 : index
    %c0_43 = arith.constant 0 : index
    %75 = vector.load %arg10[%c1_41, %c0_42, %c0_43] : memref<2x256x1xf32, #tpu.memory_space<vmem>>, vector<1x256x1xf32>
    tpu.vector_store %arg10[%c1_41, %c0_42, %c0_43], %74 {strides = array<i32>} : memref<2x256x1xf32, #tpu.memory_space<vmem>>, vector<1x256x1xf32>,
    %c1_44 = arith.constant 1 : index
    %c0_45 = arith.constant 0 : index
    %76 = vector.load %arg8[%c1_44, %c0_45] : memref<2x1xf32, #tpu.memory_space<vmem>>, vector<1x1xf32>
    tpu.vector_store %arg8[%c1_44, %c0_45], %53 {strides = array<i32>} : memref<2x1xf32, #tpu.memory_space<vmem>>, vector<1x1xf32>,
    %c0_i32_46 = arith.constant 0 : i32
    %77 = arith.cmpi eq, %arg1, %c0_i32_46 : i32
    %78 = arith.extui %77 : i1 to i32
    %c0_i32_47 = arith.constant 0 : i32
    %79 = arith.cmpi ne, %78, %c0_i32_47 : i32
    scf.if %79 {
      %c0_48 = arith.constant 0 : index
      %c0_49 = arith.constant 0 : index
      %80 = vector.load %arg5[%c0_48, %c0_49] : memref<256x5xf32, #tpu.memory_space<vmem>>, vector<256x5xf32>
      %c0_50 = arith.constant 0 : index
      %c0_51 = arith.constant 0 : index
      %81 = vector.load %arg6[%c0_50, %c0_51] : memref<1x5xf32, #tpu.memory_space<vmem>>, vector<1x5xf32>
      %c0_52 = arith.constant 0 : index
      %c0_53 = arith.constant 0 : index
      %82 = vector.load %arg9[%c0_52, %c0_53] : memref<2x1xf32, #tpu.memory_space<vmem>>, vector<1x1xf32>
      %83 = tpu.reciprocal %82 {approx = true} : vector<1x1xf32> -> vector<1x1xf32>
      %c0_54 = arith.constant 0 : index
      %c0_55 = arith.constant 0 : index
      %c0_56 = arith.constant 0 : index
      %84 = vector.load %arg10[%c0_54, %c0_55, %c0_56] : memref<2x256x1xf32, #tpu.memory_space<vmem>>, vector<1x256x1xf32>
      %85 = vector.shape_cast %84 : vector<1x256x1xf32> to vector<256x1xf32>
      %86 = vector.broadcast %83 : vector<1x1xf32> to vector<256x1xf32>
      %87 = arith.mulf %85, %86 : vector<256x1xf32>
      %88 = vector.broadcast %87 : vector<256x1xf32> to vector<256x5xf32>
      %89 = arith.mulf %88, %80 : vector<256x5xf32>
      %cst_57 = arith.constant dense<0.000000e+00> : vector<5xf32>
      %90 = vector.multi_reduction <add>, %89, %cst_57 [0] : vector<256x5xf32> to vector<5xf32>
      %91 = vector.shape_cast %90 : vector<5xf32> to vector<1x5xf32>
      %92 = arith.addf %91, %81 : vector<1x5xf32>
      %c0_58 = arith.constant 0 : index
      %c0_59 = arith.constant 0 : index
      %c0_60 = arith.constant 0 : index
      %93 = vector.load %arg7[%c0_58, %c0_59, %c0_60] : memref<2x1x5xf32, #tpu.memory_space<vmem>>, vector<1x1x5xf32>
      %94 = vector.shape_cast %93 : vector<1x1x5xf32> to vector<1x5xf32>
      %95 = vector.shape_cast %92 : vector<1x5xf32> to vector<1x1x5xf32>
      tpu.vector_store %arg7[%c0_58, %c0_59, %c0_60], %95 {strides = array<i32>} : memref<2x1x5xf32, #tpu.memory_space<vmem>>, vector<1x1x5xf32>,
      %c1_61 = arith.constant 1 : index
      %c0_62 = arith.constant 0 : index
      %96 = vector.load %arg9[%c1_61, %c0_62] : memref<2x1xf32, #tpu.memory_space<vmem>>, vector<1x1xf32>
      %97 = tpu.reciprocal %96 {approx = true} : vector<1x1xf32> -> vector<1x1xf32>
      %c1_63 = arith.constant 1 : index
      %c0_64 = arith.constant 0 : index
      %c0_65 = arith.constant 0 : index
      %98 = vector.load %arg10[%c1_63, %c0_64, %c0_65] : memref<2x256x1xf32, #tpu.memory_space<vmem>>, vector<1x256x1xf32>
      %99 = vector.shape_cast %98 : vector<1x256x1xf32> to vector<256x1xf32>
      %100 = vector.broadcast %97 : vector<1x1xf32> to vector<256x1xf32>
      %101 = arith.mulf %99, %100 : vector<256x1xf32>
      %102 = vector.broadcast %101 : vector<256x1xf32> to vector<256x5xf32>
      %103 = arith.mulf %102, %80 : vector<256x5xf32>
      %cst_66 = arith.constant dense<0.000000e+00> : vector<5xf32>
      %104 = vector.multi_reduction <add>, %103, %cst_66 [0] : vector<256x5xf32> to vector<5xf32>
      %105 = vector.shape_cast %104 : vector<5xf32> to vector<1x5xf32>
      %106 = arith.addf %105, %81 : vector<1x5xf32>
      %c1_67 = arith.constant 1 : index
      %c0_68 = arith.constant 0 : index
      %c0_69 = arith.constant 0 : index
      %107 = vector.load %arg7[%c1_67, %c0_68, %c0_69] : memref<2x1x5xf32, #tpu.memory_space<vmem>>, vector<1x1x5xf32>
      %108 = vector.shape_cast %107 : vector<1x1x5xf32> to vector<1x5xf32>
      %109 = vector.shape_cast %106 : vector<1x5xf32> to vector<1x1x5xf32>
      tpu.vector_store %arg7[%c1_67, %c0_68, %c0_69], %109 {strides = array<i32>} : memref<2x1x5xf32, #tpu.memory_space<vmem>>, vector<1x1x5xf32>,
    } else {
    }
    return
  }
  func.func @transform_0(%arg0: i32, %arg1: i32) -> (i32, i32, i32) {
    %c0_i32 = arith.constant 0 : i32
    %c0_i32_0 = arith.constant 0 : i32
    return %arg0, %c0_i32, %arg1 : i32, i32, i32
  }
  func.func @transform_1(%arg0: i32, %arg1: i32) -> (i32, i32) {
    %c0_i32 = arith.constant 0 : i32
    %c0_i32_0 = arith.constant 0 : i32
    %c0_i32_1 = arith.constant 0 : i32
    return %c0_i32, %c0_i32_0 : i32, i32
  }
  func.func @transform_2(%arg0: i32, %arg1: i32) -> (i32, i32) {
    %c0_i32 = arith.constant 0 : i32
    %c0_i32_0 = arith.constant 0 : i32
    %c0_i32_1 = arith.constant 0 : i32
    return %c0_i32, %c0_i32_0 : i32, i32
  }
  func.func @transform_3(%arg0: i32, %arg1: i32) -> (i32, i32) {
    %c0_i32 = arith.constant 0 : i32
    %c0_i32_0 = arith.constant 0 : i32
    %c0_i32_1 = arith.constant 0 : i32
    return %c0_i32, %c0_i32_0 : i32, i32
  }
  func.func @transform_4(%arg0: i32, %arg1: i32) -> (i32, i32) {
    %c0_i32 = arith.constant 0 : i32
    %c0_i32_0 = arith.constant 0 : i32
    %c0_i32_1 = arith.constant 0 : i32
    return %c0_i32, %c0_i32_0 : i32, i32
  }
  func.func @transform_5(%arg0: i32, %arg1: i32) -> (i32, i32, i32) {
    %c0_i32 = arith.constant 0 : i32
    %c0_i32_0 = arith.constant 0 : i32
    %c0_i32_1 = arith.constant 0 : i32
    return %arg0, %c0_i32, %c0_i32_0 : i32, i32, i32
  }
}

</mosaic_0001>

<llo_original>
// kernel: tpu_custom_call.1
$region0: #{tpu_custom_call.1}
  #allocation0 [shape = 'u32[]', space=smem, size = 0x4, offset = 0x4, fixed_abs, tag = 'smem constant byte address 0x4 - core index']
  #allocation1 [shape = 'u32[72,128]{1,0:T(1,128)}', space=vmem, size = 0x9000, scoped, tag = 'internal scratch']
  #allocation2 [shape = 'f32[2,1]{1,0:T(2,128)}', space=vmem, size = 0x400, scoped, tag = 'scratch operand']
  #allocation3 [shape = 'f32[2,1]{1,0:T(2,128)}', space=vmem, size = 0x400, scoped, tag = 'scratch operand']
  #allocation4 [shape = 'f32[2,256,1]{2,1,0:T(8,128)}', space=vmem, size = 0x40000, scoped, tag = 'scratch operand']
  %s0 = inlined_call_operand.vmem [shape: f32[2,256,8], index: 0, kind: input, shape index: {}]
  %s1 = inlined_call_operand.vmem [shape: bf16[256,256], index: 1, kind: input, shape index: {}]
  %s2 = inlined_call_operand.vmem [shape: f32[256,1], index: 2, kind: input, shape index: {}]
  %s3 = inlined_call_operand.vmem [shape: f32[256,5], index: 3, kind: input, shape index: {}]
  %s4 = inlined_call_operand.vmem [shape: f32[1,5], index: 4, kind: input, shape index: {}]
  %s5 = inlined_call_operand.hbm [shape: f32[2,1,5], index: 5, kind: output, shape index: {}]
  %s6 = sld [smem:[#allocation0]]
  $region38: #{tpu_custom_call.1} parent=0
    _
  %s8 = ssub.s32 1, %s6
  %s9 = scalar_select 0, %s8, %s6
  $region1: #{tpu_custom_call.1} parent=0
    #allocation5 [shape = 'u8[1024]{0}', space=vmem, size = 0x400, scoped, tag = 'output window, operand 0, single buffered']
    #allocation6 [shape = 's32[1]{0}', space=sflag, size = 0x4, scoped, tag = 'scoped memory for tpu_custom_call.1']
    %10 = vsyncpa [#allocation6], 0
    // Predicated region
    $region2: #{tpu_custom_call.1} parent=1 // pred_check
      _
    $region3: #{tpu_custom_call.1} parent=1 // pred_check_branch
      %12 = sbr.rel (0) target = $region5
    $region4: #{tpu_custom_call.1} parent=1 // pred_region
      _
    $region5: #{tpu_custom_call.1} parent=1 // pred_fallthru
      _
    // Predicated region
    $region6: #{tpu_custom_call.1} parent=1 // pred_check
      _
    $region7: #{tpu_custom_call.1} parent=1 // pred_check_branch
      %14 = sbr.rel (0) target = $region9
    $region8: #{tpu_custom_call.1} parent=1 // pred_region
      _
    $region9: #{tpu_custom_call.1} parent=1 // pred_fallthru
      _
    // Predicated region
    $region10: #{tpu_custom_call.1} parent=1 // pred_check
      _
    $region11: #{tpu_custom_call.1} parent=1 // pred_check_branch
      %16 = sbr.rel (0) target = $region13
    $region12: #{tpu_custom_call.1} parent=1 // pred_region
      _
    $region13: #{tpu_custom_call.1} parent=1 // pred_fallthru
      _
    // Predicated region
    $region14: #{tpu_custom_call.1} parent=1 // pred_check
      _
    $region15: #{tpu_custom_call.1} parent=1 // pred_check_branch
      %18 = sbr.rel (0) target = $region17
    $region16: #{tpu_custom_call.1} parent=1 // pred_region
      _
    $region17: #{tpu_custom_call.1} parent=1 // pred_fallthru
      _
    // Predicated region
    $region18: #{tpu_custom_call.1} parent=1 // pred_check
      _
    $region19: #{tpu_custom_call.1} parent=1 // pred_check_branch
      %20 = sbr.rel (0) target = $region21
    $region20: #{tpu_custom_call.1} parent=1 // pred_region
      _
    $region21: #{tpu_custom_call.1} parent=1 // pred_fallthru
      _
    %p21 = scmp.eq.s32.totalorder 0, 0
    // Predicated region
    $region22: #{tpu_custom_call.1} parent=1 // pred_check
      %p22 = pneg %p21
    $region23: #{tpu_custom_call.1} parent=1 // pred_check_branch
      %24 = sbr.rel (%p22) target = $region25
    $region24: #{tpu_custom_call.1} parent=1 // pred_region
      %vm25 = vcmask 1024
      %26 = vst.msk [vmem:[#allocation2] sm:$0x3] %vm25, -inf
      %27 = vst.msk [vmem:[#allocation3] sm:$0x3] %vm25, 0.0
      %vm28 = vcmask 7168
      %29 = vst.msk [vmem:[#allocation4] sm:$0xff] %vm28, 0.0
      %30 = vst.msk [vmem:[#allocation4 + $0x8] sm:$0xff] %vm28, 0.0
      %31 = vst.msk [vmem:[#allocation4 + $0x10] sm:$0xff] %vm28, 0.0
      %32 = vst.msk [vmem:[#allocation4 + $0x18] sm:$0xff] %vm28, 0.0
      %33 = vst.msk [vmem:[#allocation4 + $0x20] sm:$0xff] %vm28, 0.0
      %34 = vst.msk [vmem:[#allocation4 + $0x28] sm:$0xff] %vm28, 0.0
      %35 = vst.msk [vmem:[#allocation4 + $0x30] sm:$0xff] %vm28, 0.0
      %36 = vst.msk [vmem:[#allocation4 + $0x38] sm:$0xff] %vm28, 0.0
      %37 = vst.msk [vmem:[#allocation4 + $0x40] sm:$0xff] %vm28, 0.0
      %38 = vst.msk [vmem:[#allocation4 + $0x48] sm:$0xff] %vm28, 0.0
      %39 = vst.msk [vmem:[#allocation4 + $0x50] sm:$0xff] %vm28, 0.0
      %40 = vst.msk [vmem:[#allocation4 + $0x58] sm:$0xff] %vm28, 0.0
      %41 = vst.msk [vmem:[#allocation4 + $0x60] sm:$0xff] %vm28, 0.0
      %42 = vst.msk [vmem:[#allocation4 + $0x68] sm:$0xff] %vm28, 0.0
      %43 = vst.msk [vmem:[#allocation4 + $0x70] sm:$0xff] %vm28, 0.0
      %44 = vst.msk [vmem:[#allocation4 + $0x78] sm:$0xff] %vm28, 0.0
      %45 = vst.msk [vmem:[#allocation4 + $0x80] sm:$0xff] %vm28, 0.0
      %46 = vst.msk [vmem:[#allocation4 + $0x88] sm:$0xff] %vm28, 0.0
      %47 = vst.msk [vmem:[#allocation4 + $0x90] sm:$0xff] %vm28, 0.0
      %48 = vst.msk [vmem:[#allocation4 + $0x98] sm:$0xff] %vm28, 0.0
      %49 = vst.msk [vmem:[#allocation4 + $0xa0] sm:$0xff] %vm28, 0.0
      %50 = vst.msk [vmem:[#allocation4 + $0xa8] sm:$0xff] %vm28, 0.0
      %51 = vst.msk [vmem:[#allocation4 + $0xb0] sm:$0xff] %vm28, 0.0
      %52 = vst.msk [vmem:[#allocation4 + $0xb8] sm:$0xff] %vm28, 0.0
      %53 = vst.msk [vmem:[#allocation4 + $0xc0] sm:$0xff] %vm28, 0.0
      %54 = vst.msk [vmem:[#allocation4 + $0xc8] sm:$0xff] %vm28, 0.0
      %55 = vst.msk [vmem:[#allocation4 + $0xd0] sm:$0xff] %vm28, 0.0
      %56 = vst.msk [vmem:[#allocation4 + $0xd8] sm:$0xff] %vm28, 0.0
      %57 = vst.msk [vmem:[#allocation4 + $0xe0] sm:$0xff] %vm28, 0.0
      %58 = vst.msk [vmem:[#allocation4 + $0xe8] sm:$0xff] %vm28, 0.0
      %59 = vst.msk [vmem:[#allocation4 + $0xf0] sm:$0xff] %vm28, 0.0
      %60 = vst.msk [vmem:[#allocation4 + $0xf8] sm:$0xff] %vm28, 0.0
      %61 = vst.msk [vmem:[#allocation4 + $0x100] sm:$0xff] %vm28, 0.0
      %62 = vst.msk [vmem:[#allocation4 + $0x108] sm:$0xff] %vm28, 0.0
      %63 = vst.msk [vmem:[#allocation4 + $0x110] sm:$0xff] %vm28, 0.0
      %64 = vst.msk [vmem:[#allocation4 + $0x118] sm:$0xff] %vm28, 0.0
      %65 = vst.msk [vmem:[#allocation4 + $0x120] sm:$0xff] %vm28, 0.0
      %66 = vst.msk [vmem:[#allocation4 + $0x128] sm:$0xff] %vm28, 0.0
      %67 = vst.msk [vmem:[#allocation4 + $0x130] sm:$0xff] %vm28, 0.0
      %68 = vst.msk [vmem:[#allocation4 + $0x138] sm:$0xff] %vm28, 0.0
      %69 = vst.msk [vmem:[#allocation4 + $0x140] sm:$0xff] %vm28, 0.0
      %70 = vst.msk [vmem:[#allocation4 + $0x148] sm:$0xff] %vm28, 0.0
      %71 = vst.msk [vmem:[#allocation4 + $0x150] sm:$0xff] %vm28, 0.0
      %72 = vst.msk [vmem:[#allocation4 + $0x158] sm:$0xff] %vm28, 0.0
      %73 = vst.msk [vmem:[#allocation4 + $0x160] sm:$0xff] %vm28, 0.0
      %74 = vst.msk [vmem:[#allocation4 + $0x168] sm:$0xff] %vm28, 0.0
      %75 = vst.msk [vmem:[#allocation4 + $0x170] sm:$0xff] %vm28, 0.0
      %76 = vst.msk [vmem:[#allocation4 + $0x178] sm:$0xff] %vm28, 0.0
      %77 = vst.msk [vmem:[#allocation4 + $0x180] sm:$0xff] %vm28, 0.0
      %78 = vst.msk [vmem:[#allocation4 + $0x188] sm:$0xff] %vm28, 0.0
      %79 = vst.msk [vmem:[#allocation4 + $0x190] sm:$0xff] %vm28, 0.0
      %80 = vst.msk [vmem:[#allocation4 + $0x198] sm:$0xff] %vm28, 0.0
      %81 = vst.msk [vmem:[#allocation4 + $0x1a0] sm:$0xff] %vm28, 0.0
      %82 = vst.msk [vmem:[#allocation4 + $0x1a8] sm:$0xff] %vm28, 0.0
      %83 = vst.msk [vmem:[#allocation4 + $0x1b0] sm:$0xff] %vm28, 0.0
      %84 = vst.msk [vmem:[#allocation4 + $0x1b8] sm:$0xff] %vm28, 0.0
      %85 = vst.msk [vmem:[#allocation4 + $0x1c0] sm:$0xff] %vm28, 0.0
      %86 = vst.msk [vmem:[#allocation4 + $0x1c8] sm:$0xff] %vm28, 0.0
      %87 = vst.msk [vmem:[#allocation4 + $0x1d0] sm:$0xff] %vm28, 0.0
      %88 = vst.msk [vmem:[#allocation4 + $0x1d8] sm:$0xff] %vm28, 0.0
      %89 = vst.msk [vmem:[#allocation4 + $0x1e0] sm:$0xff] %vm28, 0.0
      %90 = vst.msk [vmem:[#allocation4 + $0x1e8] sm:$0xff] %vm28, 0.0
      %91 = vst.msk [vmem:[#allocation4 + $0x1f0] sm:$0xff] %vm28, 0.0
      %92 = vst.msk [vmem:[#allocation4 + $0x1f8] sm:$0xff] %vm28, 0.0
    $region25: #{tpu_custom_call.1} parent=1 // pred_fallthru
      _
    %v93 = vld [vmem:[%s1] sm:$0xff]
    %v94 = vld [vmem:[%s1 + $0x8] sm:$0xff]
    %v95 = vld [vmem:[%s1 + $0x10] sm:$0xff]
    %v96 = vld [vmem:[%s1 + $0x18] sm:$0xff]
    %v97 = vld [vmem:[%s1 + $0x20] sm:$0xff]
    %v98 = vld [vmem:[%s1 + $0x28] sm:$0xff]
    %v99 = vld [vmem:[%s1 + $0x30] sm:$0xff]
    %v100 = vld [vmem:[%s1 + $0x38] sm:$0xff]
    %v101 = vld [vmem:[%s1 + $0x40] sm:$0xff]
    %v102 = vld [vmem:[%s1 + $0x48] sm:$0xff]
    %v103 = vld [vmem:[%s1 + $0x50] sm:$0xff]
    %v104 = vld [vmem:[%s1 + $0x58] sm:$0xff]
    %v105 = vld [vmem:[%s1 + $0x60] sm:$0xff]
    %v106 = vld [vmem:[%s1 + $0x68] sm:$0xff]
    %v107 = vld [vmem:[%s1 + $0x70] sm:$0xff]
    %v108 = vld [vmem:[%s1 + $0x78] sm:$0xff]
    %v109 = vld [vmem:[%s1 + $0x80] sm:$0xff]
    %v110 = vld [vmem:[%s1 + $0x88] sm:$0xff]
    %v111 = vld [vmem:[%s1 + $0x90] sm:$0xff]
    %v112 = vld [vmem:[%s1 + $0x98] sm:$0xff]
    %v113 = vld [vmem:[%s1 + $0xa0] sm:$0xff]
    %v114 = vld [vmem:[%s1 + $0xa8] sm:$0xff]
    %v115 = vld [vmem:[%s1 + $0xb0] sm:$0xff]
    %v116 = vld [vmem:[%s1 + $0xb8] sm:$0xff]
    %v117 = vld [vmem:[%s1 + $0xc0] sm:$0xff]
    %v118 = vld [vmem:[%s1 + $0xc8] sm:$0xff]
    %v119 = vld [vmem:[%s1 + $0xd0] sm:$0xff]
    %v120 = vld [vmem:[%s1 + $0xd8] sm:$0xff]
    %v121 = vld [vmem:[%s1 + $0xe0] sm:$0xff]
    %v122 = vld [vmem:[%s1 + $0xe8] sm:$0xff]
    %v123 = vld [vmem:[%s1 + $0xf0] sm:$0xff]
    %v124 = vld [vmem:[%s1 + $0xf8] sm:$0xff]
    %v125 = vld [vmem:[%s2] sm:$0xff]
    %v126 = vld [vmem:[%s2 + $0x8] sm:$0xff]
    %v127 = vld [vmem:[%s2 + $0x10] sm:$0xff]
    %v128 = vld [vmem:[%s2 + $0x18] sm:$0xff]
    %v129 = vld [vmem:[%s2 + $0x20] sm:$0xff]
    %v130 = vld [vmem:[%s2 + $0x28] sm:$0xff]
    %v131 = vld [vmem:[%s2 + $0x30] sm:$0xff]
    %v132 = vld [vmem:[%s2 + $0x38] sm:$0xff]
    %v133 = vld [vmem:[%s2 + $0x40] sm:$0xff]
    %v134 = vld [vmem:[%s2 + $0x48] sm:$0xff]
    %v135 = vld [vmem:[%s2 + $0x50] sm:$0xff]
    %v136 = vld [vmem:[%s2 + $0x58] sm:$0xff]
    %v137 = vld [vmem:[%s2 + $0x60] sm:$0xff]
    %v138 = vld [vmem:[%s2 + $0x68] sm:$0xff]
    %v139 = vld [vmem:[%s2 + $0x70] sm:$0xff]
    %v140 = vld [vmem:[%s2 + $0x78] sm:$0xff]
    %v141 = vld [vmem:[%s2 + $0x80] sm:$0xff]
    %v142 = vld [vmem:[%s2 + $0x88] sm:$0xff]
    %v143 = vld [vmem:[%s2 + $0x90] sm:$0xff]
    %v144 = vld [vmem:[%s2 + $0x98] sm:$0xff]
    %v145 = vld [vmem:[%s2 + $0xa0] sm:$0xff]
    %v146 = vld [vmem:[%s2 + $0xa8] sm:$0xff]
    %v147 = vld [vmem:[%s2 + $0xb0] sm:$0xff]
    %v148 = vld [vmem:[%s2 + $0xb8] sm:$0xff]
    %v149 = vld [vmem:[%s2 + $0xc0] sm:$0xff]
    %v150 = vld [vmem:[%s2 + $0xc8] sm:$0xff]
    %v151 = vld [vmem:[%s2 + $0xd0] sm:$0xff]
    %v152 = vld [vmem:[%s2 + $0xd8] sm:$0xff]
    %v153 = vld [vmem:[%s2 + $0xe0] sm:$0xff]
    %v154 = vld [vmem:[%s2 + $0xe8] sm:$0xff]
    %v155 = vld [vmem:[%s2 + $0xf0] sm:$0xff]
    %v156 = vld [vmem:[%s2 + $0xf8] sm:$0xff]
    %v157 = vld [vmem:[%s0] sm:$0xff]
    %v158 = vld [vmem:[%s0 + $0x8] sm:$0xff]
    %v159 = vld [vmem:[%s0 + $0x10] sm:$0xff]
    %v160 = vld [vmem:[%s0 + $0x18] sm:$0xff]
    %v161 = vld [vmem:[%s0 + $0x20] sm:$0xff]
    %v162 = vld [vmem:[%s0 + $0x28] sm:$0xff]
    %v163 = vld [vmem:[%s0 + $0x30] sm:$0xff]
    %v164 = vld [vmem:[%s0 + $0x38] sm:$0xff]
    %v165 = vld [vmem:[%s0 + $0x40] sm:$0xff]
    %v166 = vld [vmem:[%s0 + $0x48] sm:$0xff]
    %v167 = vld [vmem:[%s0 + $0x50] sm:$0xff]
    %v168 = vld [vmem:[%s0 + $0x58] sm:$0xff]
    %v169 = vld [vmem:[%s0 + $0x60] sm:$0xff]
    %v170 = vld [vmem:[%s0 + $0x68] sm:$0xff]
    %v171 = vld [vmem:[%s0 + $0x70] sm:$0xff]
    %v172 = vld [vmem:[%s0 + $0x78] sm:$0xff]
    %v173 = vld [vmem:[%s0 + $0x80] sm:$0xff]
    %v174 = vld [vmem:[%s0 + $0x88] sm:$0xff]
    %v175 = vld [vmem:[%s0 + $0x90] sm:$0xff]
    %v176 = vld [vmem:[%s0 + $0x98] sm:$0xff]
    %v177 = vld [vmem:[%s0 + $0xa0] sm:$0xff]
    %v178 = vld [vmem:[%s0 + $0xa8] sm:$0xff]
    %v179 = vld [vmem:[%s0 + $0xb0] sm:$0xff]
    %v180 = vld [vmem:[%s0 + $0xb8] sm:$0xff]
    %v181 = vld [vmem:[%s0 + $0xc0] sm:$0xff]
    %v182 = vld [vmem:[%s0 + $0xc8] sm:$0xff]
    %v183 = vld [vmem:[%s0 + $0xd0] sm:$0xff]
    %v184 = vld [vmem:[%s0 + $0xd8] sm:$0xff]
    %v185 = vld [vmem:[%s0 + $0xe0] sm:$0xff]
    %v186 = vld [vmem:[%s0 + $0xe8] sm:$0xff]
    %v187 = vld [vmem:[%s0 + $0xf0] sm:$0xff]
    %v188 = vld [vmem:[%s0 + $0xf8] sm:$0xff]
    %v189 = vpack.c.bf16 %v158, %v157
    %v190 = vpack.c.bf16 %v160, %v159
    %v191 = vpack.c.bf16 %v162, %v161
    %v192 = vpack.c.bf16 %v164, %v163
    %v193 = vpack.c.bf16 %v166, %v165
    %v194 = vpack.c.bf16 %v168, %v167
    %v195 = vpack.c.bf16 %v170, %v169
    %v196 = vpack.c.bf16 %v172, %v171
    %v197 = vpack.c.bf16 %v174, %v173
    %v198 = vpack.c.bf16 %v176, %v175
    %v199 = vpack.c.bf16 %v178, %v177
    %v200 = vpack.c.bf16 %v180, %v179
    %v201 = vpack.c.bf16 %v182, %v181
    %v202 = vpack.c.bf16 %v184, %v183
    %v203 = vpack.c.bf16 %v186, %v185
    %v204 = vpack.c.bf16 %v188, %v187
    %v237 = vunpack.c.l.b16 %v93
    %v238 = vunpack.c.h.b16 %v93
    %v239 = vunpack.c.l.b16 %v94
    %v240 = vunpack.c.h.b16 %v94
    %v241 = vunpack.c.l.b16 %v95
    %v242 = vunpack.c.h.b16 %v95
    %v243 = vunpack.c.l.b16 %v96
    %v244 = vunpack.c.h.b16 %v96
    %v245 = vunpack.c.l.b16 %v97
    %v246 = vunpack.c.h.b16 %v97
    %v247 = vunpack.c.l.b16 %v98
    %v248 = vunpack.c.h.b16 %v98
    %v249 = vunpack.c.l.b16 %v99
    %v250 = vunpack.c.h.b16 %v99
    %v251 = vunpack.c.l.b16 %v100
    %v252 = vunpack.c.h.b16 %v100
    %v253 = vunpack.c.l.b16 %v101
    %v254 = vunpack.c.h.b16 %v101
    %v255 = vunpack.c.l.b16 %v102
    %v256 = vunpack.c.h.b16 %v102
    %v257 = vunpack.c.l.b16 %v103
    %v258 = vunpack.c.h.b16 %v103
    %v259 = vunpack.c.l.b16 %v104
    %v260 = vunpack.c.h.b16 %v104
    %v261 = vunpack.c.l.b16 %v105
    %v262 = vunpack.c.h.b16 %v105
    %v263 = vunpack.c.l.b16 %v106
    %v264 = vunpack.c.h.b16 %v106
    %v265 = vunpack.c.l.b16 %v107
    %v266 = vunpack.c.h.b16 %v107
    %v267 = vunpack.c.l.b16 %v108
    %v268 = vunpack.c.h.b16 %v108
    %v269 = vunpack.c.l.b16 %v109
    %v270 = vunpack.c.h.b16 %v109
    %v271 = vunpack.c.l.b16 %v110
    %v272 = vunpack.c.h.b16 %v110
    %v273 = vunpack.c.l.b16 %v111
    %v274 = vunpack.c.h.b16 %v111
    %v275 = vunpack.c.l.b16 %v112
    %v276 = vunpack.c.h.b16 %v112
    %v277 = vunpack.c.l.b16 %v113
    %v278 = vunpack.c.h.b16 %v113
    %v279 = vunpack.c.l.b16 %v114
    %v280 = vunpack.c.h.b16 %v114
    %v281 = vunpack.c.l.b16 %v115
    %v282 = vunpack.c.h.b16 %v115
    %v283 = vunpack.c.l.b16 %v116
    %v284 = vunpack.c.h.b16 %v116
    %v285 = vunpack.c.l.b16 %v117
    %v286 = vunpack.c.h.b16 %v117
    %v287 = vunpack.c.l.b16 %v118
    %v288 = vunpack.c.h.b16 %v118
    %v289 = vunpack.c.l.b16 %v119
    %v290 = vunpack.c.h.b16 %v119
    %v291 = vunpack.c.l.b16 %v120
    %v292 = vunpack.c.h.b16 %v120
    %v293 = vunpack.c.l.b16 %v121
    %v294 = vunpack.c.h.b16 %v121
    %v295 = vunpack.c.l.b16 %v122
    %v296 = vunpack.c.h.b16 %v122
    %v297 = vunpack.c.l.b16 %v123
    %v298 = vunpack.c.h.b16 %v123
    %v299 = vunpack.c.l.b16 %v124
    %v300 = vunpack.c.h.b16 %v124
    %v301 = vpack.c.b16 %v239, %v237
    %v302 = vpack.c.b16 %v240, %v238
    %v303 = vpack.c.b16 %v243, %v241
    %v304 = vpack.c.b16 %v244, %v242
    %v305 = vpack.c.b16 %v247, %v245
    %v306 = vpack.c.b16 %v248, %v246
    %v307 = vpack.c.b16 %v251, %v249
    %v308 = vpack.c.b16 %v252, %v250
    %v309 = vpack.c.b16 %v255, %v253
    %v310 = vpack.c.b16 %v256, %v254
    %v311 = vpack.c.b16 %v259, %v257
    %v312 = vpack.c.b16 %v260, %v258
    %v313 = vpack.c.b16 %v263, %v261
    %v314 = vpack.c.b16 %v264, %v262
    %v315 = vpack.c.b16 %v267, %v265
    %v316 = vpack.c.b16 %v268, %v266
    %v317 = vpack.c.b16 %v271, %v269
    %v318 = vpack.c.b16 %v272, %v270
    %v319 = vpack.c.b16 %v275, %v273
    %v320 = vpack.c.b16 %v276, %v274
    %v321 = vpack.c.b16 %v279, %v277
    %v322 = vpack.c.b16 %v280, %v278
    %v323 = vpack.c.b16 %v283, %v281
    %v324 = vpack.c.b16 %v284, %v282
    %v325 = vpack.c.b16 %v287, %v285
    %v326 = vpack.c.b16 %v288, %v286
    %v327 = vpack.c.b16 %v291, %v289
    %v328 = vpack.c.b16 %v292, %v290
    %v329 = vpack.c.b16 %v295, %v293
    %v330 = vpack.c.b16 %v296, %v294
    %v331 = vpack.c.b16 %v299, %v297
    %v332 = vpack.c.b16 %v300, %v298
    %365 = vmatpush.bf16.msra.mxu0 %v196
    %366 = vmatpush.bf16.msra.mxu0 %v195
    %367 = vmatpush.bf16.msra.mxu0 %v194
    %368 = vmatpush.bf16.msra.mxu0 %v193
    %369 = vmatpush.bf16.msra.mxu0 %v192
    %370 = vmatpush.bf16.msra.mxu0 %v191
    %371 = vmatpush.bf16.msra.mxu0 %v190
    %372 = vmatpush.bf16.msra.mxu0 %v189
    %373 = vmatmul.bf16.gmra.mxu0 %v301
    %v374 = vpop.f32.mrf.mxu0
    %v375 = vadd.f32 0.0, %v374
    %v376 = vpop.f32.mrf.mxu0
    %v377 = vadd.f32 0.0, %v376
    %378 = vmatmul.bf16.gmra.mxu0 %v303
    %v379 = vpop.f32.mrf.mxu0
    %v380 = vadd.f32 0.0, %v379
    %v381 = vpop.f32.mrf.mxu0
    %v382 = vadd.f32 0.0, %v381
    %383 = vmatmul.bf16.gmra.mxu0 %v305
    %v384 = vpop.f32.mrf.mxu0
    %v385 = vadd.f32 0.0, %v384
    %v386 = vpop.f32.mrf.mxu0
    %v387 = vadd.f32 0.0, %v386
    %388 = vmatmul.bf16.gmra.mxu0 %v307
    %v389 = vpop.f32.mrf.mxu0
    %v390 = vadd.f32 0.0, %v389
    %v391 = vpop.f32.mrf.mxu0
    %v392 = vadd.f32 0.0, %v391
    %393 = vmatmul.bf16.gmra.mxu0 %v309
    %v394 = vpop.f32.mrf.mxu0
    %v395 = vadd.f32 0.0, %v394
    %v396 = vpop.f32.mrf.mxu0
    %v397 = vadd.f32 0.0, %v396
    %398 = vmatmul.bf16.gmra.mxu0 %v311
    %v399 = vpop.f32.mrf.mxu0
    %v400 = vadd.f32 0.0, %v399
    %v401 = vpop.f32.mrf.mxu0
    %v402 = vadd.f32 0.0, %v401
    %403 = vmatmul.bf16.gmra.mxu0 %v313
    %v404 = vpop.f32.mrf.mxu0
    %v405 = vadd.f32 0.0, %v404
    %v406 = vpop.f32.mrf.mxu0
    %v407 = vadd.f32 0.0, %v406
    %408 = vmatmul.bf16.gmra.mxu0 %v315
    %v409 = vpop.f32.mrf.mxu0
    %v410 = vadd.f32 0.0, %v409
    %v411 = vpop.f32.mrf.mxu0
    %v412 = vadd.f32 0.0, %v411
    %413 = vmatmul.bf16.gmra.mxu0 %v317
    %v414 = vpop.f32.mrf.mxu0
    %v415 = vadd.f32 0.0, %v414
    %v416 = vpop.f32.mrf.mxu0
    %v417 = vadd.f32 0.0, %v416
    %418 = vmatmul.bf16.gmra.mxu0 %v319
    %v419 = vpop.f32.mrf.mxu0
    %v420 = vadd.f32 0.0, %v419
    %v421 = vpop.f32.mrf.mxu0
    %v422 = vadd.f32 0.0, %v421
    %423 = vmatmul.bf16.gmra.mxu0 %v321
    %v424 = vpop.f32.mrf.mxu0
    %v425 = vadd.f32 0.0, %v424
    %v426 = vpop.f32.mrf.mxu0
    %v427 = vadd.f32 0.0, %v426
    %428 = vmatmul.bf16.gmra.mxu0 %v323
    %v429 = vpop.f32.mrf.mxu0
    %v430 = vadd.f32 0.0, %v429
    %v431 = vpop.f32.mrf.mxu0
    %v432 = vadd.f32 0.0, %v431
    %433 = vmatmul.bf16.gmra.mxu0 %v325
    %v434 = vpop.f32.mrf.mxu0
    %v435 = vadd.f32 0.0, %v434
    %v436 = vpop.f32.mrf.mxu0
    %v437 = vadd.f32 0.0, %v436
    %438 = vmatmul.bf16.gmra.mxu0 %v327
    %v439 = vpop.f32.mrf.mxu0
    %v440 = vadd.f32 0.0, %v439
    %v441 = vpop.f32.mrf.mxu0
    %v442 = vadd.f32 0.0, %v441
    %443 = vmatmul.bf16.gmra.mxu0 %v329
    %v444 = vpop.f32.mrf.mxu0
    %v445 = vadd.f32 0.0, %v444
    %v446 = vpop.f32.mrf.mxu0
    %v447 = vadd.f32 0.0, %v446
    %448 = vmatmul.bf16.gmra.mxu0 %v331
    %v449 = vpop.f32.mrf.mxu0
    %v450 = vadd.f32 0.0, %v449
    %v451 = vpop.f32.mrf.mxu0
    %v452 = vadd.f32 0.0, %v451
    %453 = vdwg.mxu0
    %454 = vmatpush.bf16.msra.mxu0 %v204
    %455 = vmatpush.bf16.msra.mxu0 %v203
    %456 = vmatpush.bf16.msra.mxu0 %v202
    %457 = vmatpush.bf16.msra.mxu0 %v201
    %458 = vmatpush.bf16.msra.mxu0 %v200
    %459 = vmatpush.bf16.msra.mxu0 %v199
    %460 = vmatpush.bf16.msra.mxu0 %v198
    %461 = vmatpush.bf16.msra.mxu0 %v197
    %462 = vmatmul.bf16.gmra.mxu0 %v302
    %v463 = vpop.f32.mrf.mxu0
    %v464 = vadd.f32 %v375, %v463
    %v465 = vpop.f32.mrf.mxu0
    %v466 = vadd.f32 %v377, %v465
    %467 = vmatmul.bf16.gmra.mxu0 %v304
    %v468 = vpop.f32.mrf.mxu0
    %v469 = vadd.f32 %v380, %v468
    %v470 = vpop.f32.mrf.mxu0
    %v471 = vadd.f32 %v382, %v470
    %472 = vmatmul.bf16.gmra.mxu0 %v306
    %v473 = vpop.f32.mrf.mxu0
    %v474 = vadd.f32 %v385, %v473
    %v475 = vpop.f32.mrf.mxu0
    %v476 = vadd.f32 %v387, %v475
    %477 = vmatmul.bf16.gmra.mxu0 %v308
    %v478 = vpop.f32.mrf.mxu0
    %v479 = vadd.f32 %v390, %v478
    %v480 = vpop.f32.mrf.mxu0
    %v481 = vadd.f32 %v392, %v480
    %482 = vmatmul.bf16.gmra.mxu0 %v310
    %v483 = vpop.f32.mrf.mxu0
    %v484 = vadd.f32 %v395, %v483
    %v485 = vpop.f32.mrf.mxu0
    %v486 = vadd.f32 %v397, %v485
    %487 = vmatmul.bf16.gmra.mxu0 %v312
    %v488 = vpop.f32.mrf.mxu0
    %v489 = vadd.f32 %v400, %v488
    %v490 = vpop.f32.mrf.mxu0
    %v491 = vadd.f32 %v402, %v490
    %492 = vmatmul.bf16.gmra.mxu0 %v314
    %v493 = vpop.f32.mrf.mxu0
    %v494 = vadd.f32 %v405, %v493
    %v495 = vpop.f32.mrf.mxu0
    %v496 = vadd.f32 %v407, %v495
    %497 = vmatmul.bf16.gmra.mxu0 %v316
    %v498 = vpop.f32.mrf.mxu0
    %v499 = vadd.f32 %v410, %v498
    %v500 = vpop.f32.mrf.mxu0
    %v501 = vadd.f32 %v412, %v500
    %502 = vmatmul.bf16.gmra.mxu0 %v318
    %v503 = vpop.f32.mrf.mxu0
    %v504 = vadd.f32 %v415, %v503
    %v505 = vpop.f32.mrf.mxu0
    %v506 = vadd.f32 %v417, %v505
    %507 = vmatmul.bf16.gmra.mxu0 %v320
    %v508 = vpop.f32.mrf.mxu0
    %v509 = vadd.f32 %v420, %v508
    %v510 = vpop.f32.mrf.mxu0
    %v511 = vadd.f32 %v422, %v510
    %512 = vmatmul.bf16.gmra.mxu0 %v322
    %v513 = vpop.f32.mrf.mxu0
    %v514 = vadd.f32 %v425, %v513
    %v515 = vpop.f32.mrf.mxu0
    %v516 = vadd.f32 %v427, %v515
    %517 = vmatmul.bf16.gmra.mxu0 %v324
    %v518 = vpop.f32.mrf.mxu0
    %v519 = vadd.f32 %v430, %v518
    %v520 = vpop.f32.mrf.mxu0
    %v521 = vadd.f32 %v432, %v520
    %522 = vmatmul.bf16.gmra.mxu0 %v326
    %v523 = vpop.f32.mrf.mxu0
    %v524 = vadd.f32 %v435, %v523
    %v525 = vpop.f32.mrf.mxu0
    %v526 = vadd.f32 %v437, %v525
    %527 = vmatmul.bf16.gmra.mxu0 %v328
    %v528 = vpop.f32.mrf.mxu0
    %v529 = vadd.f32 %v440, %v528
    %v530 = vpop.f32.mrf.mxu0
    %v531 = vadd.f32 %v442, %v530
    %532 = vmatmul.bf16.gmra.mxu0 %v330
    %v533 = vpop.f32.mrf.mxu0
    %v534 = vadd.f32 %v445, %v533
    %v535 = vpop.f32.mrf.mxu0
    %v536 = vadd.f32 %v447, %v535
    %537 = vmatmul.bf16.gmra.mxu0 %v332
    %v538 = vpop.f32.mrf.mxu0
    %v539 = vadd.f32 %v450, %v538
    %v540 = vpop.f32.mrf.mxu0
    %v541 = vadd.f32 %v452, %v540
    %542 = vdwg.mxu0
    %v543 = vtanh.pop %v464
    %v544 = vtanh.pop %v466
    %v545 = vtanh.pop %v469
    %v546 = vtanh.pop %v471
    %v547 = vtanh.pop %v474
    %v548 = vtanh.pop %v476
    %v549 = vtanh.pop %v479
    %v550 = vtanh.pop %v481
    %v551 = vtanh.pop %v484
    %v552 = vtanh.pop %v486
    %v553 = vtanh.pop %v489
    %v554 = vtanh.pop %v491
    %v555 = vtanh.pop %v494
    %v556 = vtanh.pop %v496
    %v557 = vtanh.pop %v499
    %v558 = vtanh.pop %v501
    %v559 = vtanh.pop %v504
    %v560 = vtanh.pop %v506
    %v561 = vtanh.pop %v509
    %v562 = vtanh.pop %v511
    %v563 = vtanh.pop %v514
    %v564 = vtanh.pop %v516
    %v565 = vtanh.pop %v519
    %v566 = vtanh.pop %v521
    %v567 = vtanh.pop %v524
    %v568 = vtanh.pop %v526
    %v569 = vtanh.pop %v529
    %v570 = vtanh.pop %v531
    %v571 = vtanh.pop %v534
    %v572 = vtanh.pop %v536
    %v573 = vtanh.pop %v539
    %v574 = vtanh.pop %v541
    %576 = vset.pattern.permute.xlu0 0
    %577 = vperm.xlu0 %576, %v125
    %v578 = vpop.permute.xlu0 %577
    %581 = vset.pattern.permute.xlu0 0
    %582 = vperm.xlu0 %581, %v126
    %v583 = vpop.permute.xlu0 %582
    %586 = vset.pattern.permute.xlu0 0
    %587 = vperm.xlu0 %586, %v127
    %v588 = vpop.permute.xlu0 %587
    %591 = vset.pattern.permute.xlu0 0
    %592 = vperm.xlu0 %591, %v128
    %v593 = vpop.permute.xlu0 %592
    %596 = vset.pattern.permute.xlu0 0
    %597 = vperm.xlu0 %596, %v129
    %v598 = vpop.permute.xlu0 %597
    %601 = vset.pattern.permute.xlu0 0
    %602 = vperm.xlu0 %601, %v130
    %v603 = vpop.permute.xlu0 %602
    %606 = vset.pattern.permute.xlu0 0
    %607 = vperm.xlu0 %606, %v131
    %v608 = vpop.permute.xlu0 %607
    %611 = vset.pattern.permute.xlu0 0
    %612 = vperm.xlu0 %611, %v132
    %v613 = vpop.permute.xlu0 %612
    %616 = vset.pattern.permute.xlu0 0
    %617 = vperm.xlu0 %616, %v133
    %v618 = vpop.permute.xlu0 %617
    %621 = vset.pattern.permute.xlu0 0
    %622 = vperm.xlu0 %621, %v134
    %v623 = vpop.permute.xlu0 %622
    %626 = vset.pattern.permute.xlu0 0
    %627 = vperm.xlu0 %626, %v135
    %v628 = vpop.permute.xlu0 %627
    %631 = vset.pattern.permute.xlu0 0
    %632 = vperm.xlu0 %631, %v136
    %v633 = vpop.permute.xlu0 %632
    %636 = vset.pattern.permute.xlu0 0
    %637 = vperm.xlu0 %636, %v137
    %v638 = vpop.permute.xlu0 %637
    %641 = vset.pattern.permute.xlu0 0
    %642 = vperm.xlu0 %641, %v138
    %v643 = vpop.permute.xlu0 %642
    %646 = vset.pattern.permute.xlu0 0
    %647 = vperm.xlu0 %646, %v139
    %v648 = vpop.permute.xlu0 %647
    %651 = vset.pattern.permute.xlu0 0
    %652 = vperm.xlu0 %651, %v140
    %v653 = vpop.permute.xlu0 %652
    %656 = vset.pattern.permute.xlu0 0
    %657 = vperm.xlu0 %656, %v141
    %v658 = vpop.permute.xlu0 %657
    %661 = vset.pattern.permute.xlu0 0
    %662 = vperm.xlu0 %661, %v142
    %v663 = vpop.permute.xlu0 %662
    %666 = vset.pattern.permute.xlu0 0
    %667 = vperm.xlu0 %666, %v143
    %v668 = vpop.permute.xlu0 %667
    %671 = vset.pattern.permute.xlu0 0
    %672 = vperm.xlu0 %671, %v144
    %v673 = vpop.permute.xlu0 %672
    %676 = vset.pattern.permute.xlu0 0
    %677 = vperm.xlu0 %676, %v145
    %v678 = vpop.permute.xlu0 %677
    %681 = vset.pattern.permute.xlu0 0
    %682 = vperm.xlu0 %681, %v146
    %v683 = vpop.permute.xlu0 %682
    %686 = vset.pattern.permute.xlu0 0
    %687 = vperm.xlu0 %686, %v147
    %v688 = vpop.permute.xlu0 %687
    %691 = vset.pattern.permute.xlu0 0
    %692 = vperm.xlu0 %691, %v148
    %v693 = vpop.permute.xlu0 %692
    %696 = vset.pattern.permute.xlu0 0
    %697 = vperm.xlu0 %696, %v149
    %v698 = vpop.permute.xlu0 %697
    %701 = vset.pattern.permute.xlu0 0
    %702 = vperm.xlu0 %701, %v150
    %v703 = vpop.permute.xlu0 %702
    %706 = vset.pattern.permute.xlu0 0
    %707 = vperm.xlu0 %706, %v151
    %v708 = vpop.permute.xlu0 %707
    %711 = vset.pattern.permute.xlu0 0
    %712 = vperm.xlu0 %711, %v152
    %v713 = vpop.permute.xlu0 %712
    %716 = vset.pattern.permute.xlu0 0
    %717 = vperm.xlu0 %716, %v153
    %v718 = vpop.permute.xlu0 %717
    %721 = vset.pattern.permute.xlu0 0
    %722 = vperm.xlu0 %721, %v154
    %v723 = vpop.permute.xlu0 %722
    %726 = vset.pattern.permute.xlu0 0
    %727 = vperm.xlu0 %726, %v155
    %v728 = vpop.permute.xlu0 %727
    %731 = vset.pattern.permute.xlu0 0
    %732 = vperm.xlu0 %731, %v156
    %v733 = vpop.permute.xlu0 %732
    %v735 = vmul.f32 %v543, %v578
    %v736 = vmul.f32 %v544, %v583
    %v737 = vmul.f32 %v545, %v588
    %v738 = vmul.f32 %v546, %v593
    %v739 = vmul.f32 %v547, %v598
    %v740 = vmul.f32 %v548, %v603
    %v741 = vmul.f32 %v549, %v608
    %v742 = vmul.f32 %v550, %v613
    %v743 = vmul.f32 %v551, %v618
    %v744 = vmul.f32 %v552, %v623
    %v745 = vmul.f32 %v553, %v628
    %v746 = vmul.f32 %v554, %v633
    %v747 = vmul.f32 %v555, %v638
    %v748 = vmul.f32 %v556, %v643
    %v749 = vmul.f32 %v557, %v648
    %v750 = vmul.f32 %v558, %v653
    %v751 = vmul.f32 %v559, %v658
    %v752 = vmul.f32 %v560, %v663
    %v753 = vmul.f32 %v561, %v668
    %v754 = vmul.f32 %v562, %v673
    %v755 = vmul.f32 %v563, %v678
    %v756 = vmul.f32 %v564, %v683
    %v757 = vmul.f32 %v565, %v688
    %v758 = vmul.f32 %v566, %v693
    %v759 = vmul.f32 %v567, %v698
    %v760 = vmul.f32 %v568, %v703
    %v761 = vmul.f32 %v569, %v708
    %v762 = vmul.f32 %v570, %v713
    %v763 = vmul.f32 %v571, %v718
    %v764 = vmul.f32 %v572, %v723
    %v765 = vmul.f32 %v573, %v728
    %v766 = vmul.f32 %v574, %v733
    %vm767 = vcmask 64512
    %v768 = vsel %vm767, %v735, 0.0
    %v769 = vsel %vm767, %v736, 0.0
    %v770 = vadd.f32 %v768, %v769
    %v771 = vsel %vm767, %v737, 0.0
    %v772 = vadd.f32 %v770, %v771
    %v773 = vsel %vm767, %v738, 0.0
    %v774 = vadd.f32 %v772, %v773
    %v775 = vsel %vm767, %v739, 0.0
    %v776 = vadd.f32 %v774, %v775
    %v777 = vsel %vm767, %v740, 0.0
    %v778 = vadd.f32 %v776, %v777
    %v779 = vsel %vm767, %v741, 0.0
    %v780 = vadd.f32 %v778, %v779
    %v781 = vsel %vm767, %v742, 0.0
    %v782 = vadd.f32 %v780, %v781
    %v783 = vsel %vm767, %v743, 0.0
    %v784 = vadd.f32 %v782, %v783
    %v785 = vsel %vm767, %v744, 0.0
    %v786 = vadd.f32 %v784, %v785
    %v787 = vsel %vm767, %v745, 0.0
    %v788 = vadd.f32 %v786, %v787
    %v789 = vsel %vm767, %v746, 0.0
    %v790 = vadd.f32 %v788, %v789
    %v791 = vsel %vm767, %v747, 0.0
    %v792 = vadd.f32 %v790, %v791
    %v793 = vsel %vm767, %v748, 0.0
    %v794 = vadd.f32 %v792, %v793
    %v795 = vsel %vm767, %v749, 0.0
    %v796 = vadd.f32 %v794, %v795
    %v797 = vsel %vm767, %v750, 0.0
    %v798 = vadd.f32 %v796, %v797
    %v799 = vsel %vm767, %v751, 0.0
    %v800 = vadd.f32 %v798, %v799
    %v801 = vsel %vm767, %v752, 0.0
    %v802 = vadd.f32 %v800, %v801
    %v803 = vsel %vm767, %v753, 0.0
    %v804 = vadd.f32 %v802, %v803
    %v805 = vsel %vm767, %v754, 0.0
    %v806 = vadd.f32 %v804, %v805
    %v807 = vsel %vm767, %v755, 0.0
    %v808 = vadd.f32 %v806, %v807
    %v809 = vsel %vm767, %v756, 0.0
    %v810 = vadd.f32 %v808, %v809
    %v811 = vsel %vm767, %v757, 0.0
    %v812 = vadd.f32 %v810, %v811
    %v813 = vsel %vm767, %v758, 0.0
    %v814 = vadd.f32 %v812, %v813
    %v815 = vsel %vm767, %v759, 0.0
    %v816 = vadd.f32 %v814, %v815
    %v817 = vsel %vm767, %v760, 0.0
    %v818 = vadd.f32 %v816, %v817
    %v819 = vsel %vm767, %v761, 0.0
    %v820 = vadd.f32 %v818, %v819
    %v821 = vsel %vm767, %v762, 0.0
    %v822 = vadd.f32 %v820, %v821
    %v823 = vsel %vm767, %v763, 0.0
    %v824 = vadd.f32 %v822, %v823
    %v825 = vsel %vm767, %v764, 0.0
    %v826 = vadd.f32 %v824, %v825
    %v827 = vsel %vm767, %v765, 0.0
    %v828 = vadd.f32 %v826, %v827
    %v829 = vsel %vm767, %v766, 0.0
    %v830 = vadd.f32 %v828, %v829
    %v831 = vrot.slane %v830, 4
    %v832 = vadd.f32 %v830, %v831
    %v833 = vrot.slane %v832, 2
    %v834 = vadd.f32 %v832, %v833
    %v835 = vrot.slane %v834, 1
    %v836 = vadd.f32 %v834, %v835
    %v837 = vld [vmem:[#allocation2] sm:$0x1]
    %v838 = vsel %vm767, %v836, -inf
    %839 = vmax.xlane.f32.xlu0 %v838
    %v840 = vpop.xlane.xlu0 %839
    %v841 = vmax.f32 %v837, %v840
    %v842 = vsub.f32 %v837, %v841
    %v843 = vmul.f32 %v842, 1.442695
    %v844 = vpow.pop %v843
    %846 = vset.pattern.permute.xlu0 0
    %847 = vperm.xlu0 %846, %v841
    %v848 = vpop.permute.xlu0 %847
    %v850 = vsub.f32 %v836, %v848
    %v851 = vmul.f32 %v850, 1.442695
    %v852 = vpow.pop %v851
    %v853 = vperm.slane %v852, 0
    %v854 = vmul.f32 %v157, %v853
    %v855 = vmul.f32 %v158, %v853
    %v856 = vmul.f32 %v159, %v853
    %v857 = vmul.f32 %v160, %v853
    %v858 = vmul.f32 %v161, %v853
    %v859 = vmul.f32 %v162, %v853
    %v860 = vmul.f32 %v163, %v853
    %v861 = vmul.f32 %v164, %v853
    %v862 = vmul.f32 %v165, %v853
    %v863 = vmul.f32 %v166, %v853
    %v864 = vmul.f32 %v167, %v853
    %v865 = vmul.f32 %v168, %v853
    %v866 = vmul.f32 %v169, %v853
    %v867 = vmul.f32 %v170, %v853
    %v868 = vmul.f32 %v171, %v853
    %v869 = vmul.f32 %v172, %v853
    %v870 = vmul.f32 %v173, %v853
    %v871 = vmul.f32 %v174, %v853
    %v872 = vmul.f32 %v175, %v853
    %v873 = vmul.f32 %v176, %v853
    %v874 = vmul.f32 %v177, %v853
    %v875 = vmul.f32 %v178, %v853
    %v876 = vmul.f32 %v179, %v853
    %v877 = vmul.f32 %v180, %v853
    %v878 = vmul.f32 %v181, %v853
    %v879 = vmul.f32 %v182, %v853
    %v880 = vmul.f32 %v183, %v853
    %v881 = vmul.f32 %v184, %v853
    %v882 = vmul.f32 %v185, %v853
    %v883 = vmul.f32 %v186, %v853
    %v884 = vmul.f32 %v187, %v853
    %v885 = vmul.f32 %v188, %v853
    %v886 = vsel %vm767, %v854, 0.0
    %887 = vadd.xlane.f32.xlu0 %v886
    %v888 = vpop.xlane.xlu0 %887
    %v889 = vsel %vm767, %v855, 0.0
    %890 = vadd.xlane.f32.xlu0 %v889
    %v891 = vpop.xlane.xlu0 %890
    %v892 = vsel %vm767, %v856, 0.0
    %893 = vadd.xlane.f32.xlu0 %v892
    %v894 = vpop.xlane.xlu0 %893
    %v895 = vsel %vm767, %v857, 0.0
    %896 = vadd.xlane.f32.xlu0 %v895
    %v897 = vpop.xlane.xlu0 %896
    %v898 = vsel %vm767, %v858, 0.0
    %899 = vadd.xlane.f32.xlu0 %v898
    %v900 = vpop.xlane.xlu0 %899
    %v901 = vsel %vm767, %v859, 0.0
    %902 = vadd.xlane.f32.xlu0 %v901
    %v903 = vpop.xlane.xlu0 %902
    %v904 = vsel %vm767, %v860, 0.0
    %905 = vadd.xlane.f32.xlu0 %v904
    %v906 = vpop.xlane.xlu0 %905
    %v907 = vsel %vm767, %v861, 0.0
    %908 = vadd.xlane.f32.xlu0 %v907
    %v909 = vpop.xlane.xlu0 %908
    %v910 = vsel %vm767, %v862, 0.0
    %911 = vadd.xlane.f32.xlu0 %v910
    %v912 = vpop.xlane.xlu0 %911
    %v913 = vsel %vm767, %v863, 0.0
    %914 = vadd.xlane.f32.xlu0 %v913
    %v915 = vpop.xlane.xlu0 %914
    %v916 = vsel %vm767, %v864, 0.0
    %917 = vadd.xlane.f32.xlu0 %v916
    %v918 = vpop.xlane.xlu0 %917
    %v919 = vsel %vm767, %v865, 0.0
    %920 = vadd.xlane.f32.xlu0 %v919
    %v921 = vpop.xlane.xlu0 %920
    %v922 = vsel %vm767, %v866, 0.0
    %923 = vadd.xlane.f32.xlu0 %v922
    %v924 = vpop.xlane.xlu0 %923
    %v925 = vsel %vm767, %v867, 0.0
    %926 = vadd.xlane.f32.xlu0 %v925
    %v927 = vpop.xlane.xlu0 %926
    %v928 = vsel %vm767, %v868, 0.0
    %929 = vadd.xlane.f32.xlu0 %v928
    %v930 = vpop.xlane.xlu0 %929
    %v931 = vsel %vm767, %v869, 0.0
    %932 = vadd.xlane.f32.xlu0 %v931
    %v933 = vpop.xlane.xlu0 %932
    %v934 = vsel %vm767, %v870, 0.0
    %935 = vadd.xlane.f32.xlu0 %v934
    %v936 = vpop.xlane.xlu0 %935
    %v937 = vsel %vm767, %v871, 0.0
    %938 = vadd.xlane.f32.xlu0 %v937
    %v939 = vpop.xlane.xlu0 %938
    %v940 = vsel %vm767, %v872, 0.0
    %941 = vadd.xlane.f32.xlu0 %v940
    %v942 = vpop.xlane.xlu0 %941
    %v943 = vsel %vm767, %v873, 0.0
    %944 = vadd.xlane.f32.xlu0 %v943
    %v945 = vpop.xlane.xlu0 %944
    %v946 = vsel %vm767, %v874, 0.0
    %947 = vadd.xlane.f32.xlu0 %v946
    %v948 = vpop.xlane.xlu0 %947
    %v949 = vsel %vm767, %v875, 0.0
    %950 = vadd.xlane.f32.xlu0 %v949
    %v951 = vpop.xlane.xlu0 %950
    %v952 = vsel %vm767, %v876, 0.0
    %953 = vadd.xlane.f32.xlu0 %v952
    %v954 = vpop.xlane.xlu0 %953
    %v955 = vsel %vm767, %v877, 0.0
    %956 = vadd.xlane.f32.xlu0 %v955
    %v957 = vpop.xlane.xlu0 %956
    %v958 = vsel %vm767, %v878, 0.0
    %959 = vadd.xlane.f32.xlu0 %v958
    %v960 = vpop.xlane.xlu0 %959
    %v961 = vsel %vm767, %v879, 0.0
    %962 = vadd.xlane.f32.xlu0 %v961
    %v963 = vpop.xlane.xlu0 %962
    %v964 = vsel %vm767, %v880, 0.0
    %965 = vadd.xlane.f32.xlu0 %v964
    %v966 = vpop.xlane.xlu0 %965
    %v967 = vsel %vm767, %v881, 0.0
    %968 = vadd.xlane.f32.xlu0 %v967
    %v969 = vpop.xlane.xlu0 %968
    %v970 = vsel %vm767, %v882, 0.0
    %971 = vadd.xlane.f32.xlu0 %v970
    %v972 = vpop.xlane.xlu0 %971
    %v973 = vsel %vm767, %v883, 0.0
    %974 = vadd.xlane.f32.xlu0 %v973
    %v975 = vpop.xlane.xlu0 %974
    %v976 = vsel %vm767, %v884, 0.0
    %977 = vadd.xlane.f32.xlu0 %v976
    %v978 = vpop.xlane.xlu0 %977
    %v979 = vsel %vm767, %v885, 0.0
    %980 = vadd.xlane.f32.xlu0 %v979
    %v981 = vpop.xlane.xlu0 %980
    %v982 = vld [vmem:[#allocation3] sm:$0x1]
    %v983 = vmul.f32 %v844, %v982
    %vm984 = vcmask 57344
    %v985 = vsel %vm984, %v852, 0.0
    %986 = vadd.xlane.f32.xlu0 %v985
    %v987 = vpop.xlane.xlu0 %986
    %v988 = vadd.f32 %v983, %v987
    %vm989 = vcmask 0
    %990 = vst.msk [vmem:[#allocation3] sm:$0x1] %vm989, %v988
    %v991 = vld [vmem:[#allocation4] sm:$0xff]
    %v992 = vld [vmem:[#allocation4 + $0x8] sm:$0xff]
    %v993 = vld [vmem:[#allocation4 + $0x10] sm:$0xff]
    %v994 = vld [vmem:[#allocation4 + $0x18] sm:$0xff]
    %v995 = vld [vmem:[#allocation4 + $0x20] sm:$0xff]
    %v996 = vld [vmem:[#allocation4 + $0x28] sm:$0xff]
    %v997 = vld [vmem:[#allocation4 + $0x30] sm:$0xff]
    %v998 = vld [vmem:[#allocation4 + $0x38] sm:$0xff]
    %v999 = vld [vmem:[#allocation4 + $0x40] sm:$0xff]
    %v1000 = vld [vmem:[#allocation4 + $0x48] sm:$0xff]
    %v1001 = vld [vmem:[#allocation4 + $0x50] sm:$0xff]
    %v1002 = vld [vmem:[#allocation4 + $0x58] sm:$0xff]
    %v1003 = vld [vmem:[#allocation4 + $0x60] sm:$0xff]
    %v1004 = vld [vmem:[#allocation4 + $0x68] sm:$0xff]
    %v1005 = vld [vmem:[#allocation4 + $0x70] sm:$0xff]
    %v1006 = vld [vmem:[#allocation4 + $0x78] sm:$0xff]
    %v1007 = vld [vmem:[#allocation4 + $0x80] sm:$0xff]
    %v1008 = vld [vmem:[#allocation4 + $0x88] sm:$0xff]
    %v1009 = vld [vmem:[#allocation4 + $0x90] sm:$0xff]
    %v1010 = vld [vmem:[#allocation4 + $0x98] sm:$0xff]
    %v1011 = vld [vmem:[#allocation4 + $0xa0] sm:$0xff]
    %v1012 = vld [vmem:[#allocation4 + $0xa8] sm:$0xff]
    %v1013 = vld [vmem:[#allocation4 + $0xb0] sm:$0xff]
    %v1014 = vld [vmem:[#allocation4 + $0xb8] sm:$0xff]
    %v1015 = vld [vmem:[#allocation4 + $0xc0] sm:$0xff]
    %v1016 = vld [vmem:[#allocation4 + $0xc8] sm:$0xff]
    %v1017 = vld [vmem:[#allocation4 + $0xd0] sm:$0xff]
    %v1018 = vld [vmem:[#allocation4 + $0xd8] sm:$0xff]
    %v1019 = vld [vmem:[#allocation4 + $0xe0] sm:$0xff]
    %v1020 = vld [vmem:[#allocation4 + $0xe8] sm:$0xff]
    %v1021 = vld [vmem:[#allocation4 + $0xf0] sm:$0xff]
    %v1022 = vld [vmem:[#allocation4 + $0xf8] sm:$0xff]
    %v1023 = vperm.slane %v844, 0
    %v1024 = vmul.f32 %v1023, %v991
    %v1025 = vmul.f32 %v1023, %v992
    %v1026 = vmul.f32 %v1023, %v993
    %v1027 = vmul.f32 %v1023, %v994
    %v1028 = vmul.f32 %v1023, %v995
    %v1029 = vmul.f32 %v1023, %v996
    %v1030 = vmul.f32 %v1023, %v997
    %v1031 = vmul.f32 %v1023, %v998
    %v1032 = vmul.f32 %v1023, %v999
    %v1033 = vmul.f32 %v1023, %v1000
    %v1034 = vmul.f32 %v1023, %v1001
    %v1035 = vmul.f32 %v1023, %v1002
    %v1036 = vmul.f32 %v1023, %v1003
    %v1037 = vmul.f32 %v1023, %v1004
    %v1038 = vmul.f32 %v1023, %v1005
    %v1039 = vmul.f32 %v1023, %v1006
    %v1040 = vmul.f32 %v1023, %v1007
    %v1041 = vmul.f32 %v1023, %v1008
    %v1042 = vmul.f32 %v1023, %v1009
    %v1043 = vmul.f32 %v1023, %v1010
    %v1044 = vmul.f32 %v1023, %v1011
    %v1045 = vmul.f32 %v1023, %v1012
    %v1046 = vmul.f32 %v1023, %v1013
    %v1047 = vmul.f32 %v1023, %v1014
    %v1048 = vmul.f32 %v1023, %v1015
    %v1049 = vmul.f32 %v1023, %v1016
    %v1050 = vmul.f32 %v1023, %v1017
    %v1051 = vmul.f32 %v1023, %v1018
    %v1052 = vmul.f32 %v1023, %v1019
    %v1053 = vmul.f32 %v1023, %v1020
    %v1054 = vmul.f32 %v1023, %v1021
    %v1055 = vmul.f32 %v1023, %v1022
    %v1056 = vadd.f32 %v1024, %v888
    %v1057 = vadd.f32 %v1025, %v891
    %v1058 = vadd.f32 %v1026, %v894
    %v1059 = vadd.f32 %v1027, %v897
    %v1060 = vadd.f32 %v1028, %v900
    %v1061 = vadd.f32 %v1029, %v903
    %v1062 = vadd.f32 %v1030, %v906
    %v1063 = vadd.f32 %v1031, %v909
    %v1064 = vadd.f32 %v1032, %v912
    %v1065 = vadd.f32 %v1033, %v915
    %v1066 = vadd.f32 %v1034, %v918
    %v1067 = vadd.f32 %v1035, %v921
    %v1068 = vadd.f32 %v1036, %v924
    %v1069 = vadd.f32 %v1037, %v927
    %v1070 = vadd.f32 %v1038, %v930
    %v1071 = vadd.f32 %v1039, %v933
    %v1072 = vadd.f32 %v1040, %v936
    %v1073 = vadd.f32 %v1041, %v939
    %v1074 = vadd.f32 %v1042, %v942
    %v1075 = vadd.f32 %v1043, %v945
    %v1076 = vadd.f32 %v1044, %v948
    %v1077 = vadd.f32 %v1045, %v951
    %v1078 = vadd.f32 %v1046, %v954
    %v1079 = vadd.f32 %v1047, %v957
    %v1080 = vadd.f32 %v1048, %v960
    %v1081 = vadd.f32 %v1049, %v963
    %v1082 = vadd.f32 %v1050, %v966
    %v1083 = vadd.f32 %v1051, %v969
    %v1084 = vadd.f32 %v1052, %v972
    %v1085 = vadd.f32 %v1053, %v975
    %v1086 = vadd.f32 %v1054, %v978
    %v1087 = vadd.f32 %v1055, %v981
    %vm1088 = vcmask 7168
    %1089 = vst.msk [vmem:[#allocation4] sm:$0xff] %vm1088, %v1056
    %1090 = vst.msk [vmem:[#allocation4 + $0x8] sm:$0xff] %vm1088, %v1057
    %1091 = vst.msk [vmem:[#allocation4 + $0x10] sm:$0xff] %vm1088, %v1058
    %1092 = vst.msk [vmem:[#allocation4 + $0x18] sm:$0xff] %vm1088, %v1059
    %1093 = vst.msk [vmem:[#allocation4 + $0x20] sm:$0xff] %vm1088, %v1060
    %1094 = vst.msk [vmem:[#allocation4 + $0x28] sm:$0xff] %vm1088, %v1061
    %1095 = vst.msk [vmem:[#allocation4 + $0x30] sm:$0xff] %vm1088, %v1062
    %1096 = vst.msk [vmem:[#allocation4 + $0x38] sm:$0xff] %vm1088, %v1063
    %1097 = vst.msk [vmem:[#allocation4 + $0x40] sm:$0xff] %vm1088, %v1064
    %1098 = vst.msk [vmem:[#allocation4 + $0x48] sm:$0xff] %vm1088, %v1065
    %1099 = vst.msk [vmem:[#allocation4 + $0x50] sm:$0xff] %vm1088, %v1066
    %1100 = vst.msk [vmem:[#allocation4 + $0x58] sm:$0xff] %vm1088, %v1067
    %1101 = vst.msk [vmem:[#allocation4 + $0x60] sm:$0xff] %vm1088, %v1068
    %1102 = vst.msk [vmem:[#allocation4 + $0x68] sm:$0xff] %vm1088, %v1069
    %1103 = vst.msk [vmem:[#allocation4 + $0x70] sm:$0xff] %vm1088, %v1070
    %1104 = vst.msk [vmem:[#allocation4 + $0x78] sm:$0xff] %vm1088, %v1071
    %1105 = vst.msk [vmem:[#allocation4 + $0x80] sm:$0xff] %vm1088, %v1072
    %1106 = vst.msk [vmem:[#allocation4 + $0x88] sm:$0xff] %vm1088, %v1073
    %1107 = vst.msk [vmem:[#allocation4 + $0x90] sm:$0xff] %vm1088, %v1074
    %1108 = vst.msk [vmem:[#allocation4 + $0x98] sm:$0xff] %vm1088, %v1075
    %1109 = vst.msk [vmem:[#allocation4 + $0xa0] sm:$0xff] %vm1088, %v1076
    %1110 = vst.msk [vmem:[#allocation4 + $0xa8] sm:$0xff] %vm1088, %v1077
    %1111 = vst.msk [vmem:[#allocation4 + $0xb0] sm:$0xff] %vm1088, %v1078
    %1112 = vst.msk [vmem:[#allocation4 + $0xb8] sm:$0xff] %vm1088, %v1079
    %1113 = vst.msk [vmem:[#allocation4 + $0xc0] sm:$0xff] %vm1088, %v1080
    %1114 = vst.msk [vmem:[#allocation4 + $0xc8] sm:$0xff] %vm1088, %v1081
    %1115 = vst.msk [vmem:[#allocation4 + $0xd0] sm:$0xff] %vm1088, %v1082
    %1116 = vst.msk [vmem:[#allocation4 + $0xd8] sm:$0xff] %vm1088, %v1083
    %1117 = vst.msk [vmem:[#allocation4 + $0xe0] sm:$0xff] %vm1088, %v1084
    %1118 = vst.msk [vmem:[#allocation4 + $0xe8] sm:$0xff] %vm1088, %v1085
    %1119 = vst.msk [vmem:[#allocation4 + $0xf0] sm:$0xff] %vm1088, %v1086
    %1120 = vst.msk [vmem:[#allocation4 + $0xf8] sm:$0xff] %vm1088, %v1087
    %1121 = vst.msk [vmem:[#allocation2] sm:$0x1] %vm989, %v841
    %s1122 = scalar_lea.vmem %s0, 256
    %v1123 = vld [vmem:[%s1122] sm:$0xff]
    %v1124 = vld [vmem:[%s1122 + $0x8] sm:$0xff]
    %v1125 = vld [vmem:[%s1122 + $0x10] sm:$0xff]
    %v1126 = vld [vmem:[%s1122 + $0x18] sm:$0xff]
    %v1127 = vld [vmem:[%s1122 + $0x20] sm:$0xff]
    %v1128 = vld [vmem:[%s1122 + $0x28] sm:$0xff]
    %v1129 = vld [vmem:[%s1122 + $0x30] sm:$0xff]
    %v1130 = vld [vmem:[%s1122 + $0x38] sm:$0xff]
    %v1131 = vld [vmem:[%s1122 + $0x40] sm:$0xff]
    %v1132 = vld [vmem:[%s1122 + $0x48] sm:$0xff]
    %v1133 = vld [vmem:[%s1122 + $0x50] sm:$0xff]
    %v1134 = vld [vmem:[%s1122 + $0x58] sm:$0xff]
    %v1135 = vld [vmem:[%s1122 + $0x60] sm:$0xff]
    %v1136 = vld [vmem:[%s1122 + $0x68] sm:$0xff]
    %v1137 = vld [vmem:[%s1122 + $0x70] sm:$0xff]
    %v1138 = vld [vmem:[%s1122 + $0x78] sm:$0xff]
    %v1139 = vld [vmem:[%s1122 + $0x80] sm:$0xff]
    %v1140 = vld [vmem:[%s1122 + $0x88] sm:$0xff]
    %v1141 = vld [vmem:[%s1122 + $0x90] sm:$0xff]
    %v1142 = vld [vmem:[%s1122 + $0x98] sm:$0xff]
    %v1143 = vld [vmem:[%s1122 + $0xa0] sm:$0xff]
    %v1144 = vld [vmem:[%s1122 + $0xa8] sm:$0xff]
    %v1145 = vld [vmem:[%s1122 + $0xb0] sm:$0xff]
    %v1146 = vld [vmem:[%s1122 + $0xb8] sm:$0xff]
    %v1147 = vld [vmem:[%s1122 + $0xc0] sm:$0xff]
    %v1148 = vld [vmem:[%s1122 + $0xc8] sm:$0xff]
    %v1149 = vld [vmem:[%s1122 + $0xd0] sm:$0xff]
    %v1150 = vld [vmem:[%s1122 + $0xd8] sm:$0xff]
    %v1151 = vld [vmem:[%s1122 + $0xe0] sm:$0xff]
    %v1152 = vld [vmem:[%s1122 + $0xe8] sm:$0xff]
    %v1153 = vld [vmem:[%s1122 + $0xf0] sm:$0xff]
    %v1154 = vld [vmem:[%s1122 + $0xf8] sm:$0xff]
    %v1155 = vpack.c.bf16 %v1124, %v1123
    %v1156 = vpack.c.bf16 %v1126, %v1125
    %v1157 = vpack.c.bf16 %v1128, %v1127
    %v1158 = vpack.c.bf16 %v1130, %v1129
    %v1159 = vpack.c.bf16 %v1132, %v1131
    %v1160 = vpack.c.bf16 %v1134, %v1133
    %v1161 = vpack.c.bf16 %v1136, %v1135
    %v1162 = vpack.c.bf16 %v1138, %v1137
    %v1163 = vpack.c.bf16 %v1140, %v1139
    %v1164 = vpack.c.bf16 %v1142, %v1141
    %v1165 = vpack.c.bf16 %v1144, %v1143
    %v1166 = vpack.c.bf16 %v1146, %v1145
    %v1167 = vpack.c.bf16 %v1148, %v1147
    %v1168 = vpack.c.bf16 %v1150, %v1149
    %v1169 = vpack.c.bf16 %v1152, %v1151
    %v1170 = vpack.c.bf16 %v1154, %v1153
    %1171 = vmatpush.bf16.msra.mxu0 %v1162
    %1172 = vmatpush.bf16.msra.mxu0 %v1161
    %1173 = vmatpush.bf16.msra.mxu0 %v1160
    %1174 = vmatpush.bf16.msra.mxu0 %v1159
    %1175 = vmatpush.bf16.msra.mxu0 %v1158
    %1176 = vmatpush.bf16.msra.mxu0 %v1157
    %1177 = vmatpush.bf16.msra.mxu0 %v1156
    %1178 = vmatpush.bf16.msra.mxu0 %v1155
    %1179 = vmatmul.bf16.gmra.mxu0 %v301
    %v1180 = vpop.f32.mrf.mxu0
    %v1181 = vadd.f32 0.0, %v1180
    %v1182 = vpop.f32.mrf.mxu0
    %v1183 = vadd.f32 0.0, %v1182
    %1184 = vmatmul.bf16.gmra.mxu0 %v303
    %v1185 = vpop.f32.mrf.mxu0
    %v1186 = vadd.f32 0.0, %v1185
    %v1187 = vpop.f32.mrf.mxu0
    %v1188 = vadd.f32 0.0, %v1187
    %1189 = vmatmul.bf16.gmra.mxu0 %v305
    %v1190 = vpop.f32.mrf.mxu0
    %v1191 = vadd.f32 0.0, %v1190
    %v1192 = vpop.f32.mrf.mxu0
    %v1193 = vadd.f32 0.0, %v1192
    %1194 = vmatmul.bf16.gmra.mxu0 %v307
    %v1195 = vpop.f32.mrf.mxu0
    %v1196 = vadd.f32 0.0, %v1195
    %v1197 = vpop.f32.mrf.mxu0
    %v1198 = vadd.f32 0.0, %v1197
    %1199 = vmatmul.bf16.gmra.mxu0 %v309
    %v1200 = vpop.f32.mrf.mxu0
    %v1201 = vadd.f32 0.0, %v1200
    %v1202 = vpop.f32.mrf.mxu0
    %v1203 = vadd.f32 0.0, %v1202
    %1204 = vmatmul.bf16.gmra.mxu0 %v311
    %v1205 = vpop.f32.mrf.mxu0
    %v1206 = vadd.f32 0.0, %v1205
    %v1207 = vpop.f32.mrf.mxu0
    %v1208 = vadd.f32 0.0, %v1207
    %1209 = vmatmul.bf16.gmra.mxu0 %v313
    %v1210 = vpop.f32.mrf.mxu0
    %v1211 = vadd.f32 0.0, %v1210
    %v1212 = vpop.f32.mrf.mxu0
    %v1213 = vadd.f32 0.0, %v1212
    %1214 = vmatmul.bf16.gmra.mxu0 %v315
    %v1215 = vpop.f32.mrf.mxu0
    %v1216 = vadd.f32 0.0, %v1215
    %v1217 = vpop.f32.mrf.mxu0
    %v1218 = vadd.f32 0.0, %v1217
    %1219 = vmatmul.bf16.gmra.mxu0 %v317
    %v1220 = vpop.f32.mrf.mxu0
    %v1221 = vadd.f32 0.0, %v1220
    %v1222 = vpop.f32.mrf.mxu0
    %v1223 = vadd.f32 0.0, %v1222
    %1224 = vmatmul.bf16.gmra.mxu0 %v319
    %v1225 = vpop.f32.mrf.mxu0
    %v1226 = vadd.f32 0.0, %v1225
    %v1227 = vpop.f32.mrf.mxu0
    %v1228 = vadd.f32 0.0, %v1227
    %1229 = vmatmul.bf16.gmra.mxu0 %v321
    %v1230 = vpop.f32.mrf.mxu0
    %v1231 = vadd.f32 0.0, %v1230
    %v1232 = vpop.f32.mrf.mxu0
    %v1233 = vadd.f32 0.0, %v1232
    %1234 = vmatmul.bf16.gmra.mxu0 %v323
    %v1235 = vpop.f32.mrf.mxu0
    %v1236 = vadd.f32 0.0, %v1235
    %v1237 = vpop.f32.mrf.mxu0
    %v1238 = vadd.f32 0.0, %v1237
    %1239 = vmatmul.bf16.gmra.mxu0 %v325
    %v1240 = vpop.f32.mrf.mxu0
    %v1241 = vadd.f32 0.0, %v1240
    %v1242 = vpop.f32.mrf.mxu0
    %v1243 = vadd.f32 0.0, %v1242
    %1244 = vmatmul.bf16.gmra.mxu0 %v327
    %v1245 = vpop.f32.mrf.mxu0
    %v1246 = vadd.f32 0.0, %v1245
    %v1247 = vpop.f32.mrf.mxu0
    %v1248 = vadd.f32 0.0, %v1247
    %1249 = vmatmul.bf16.gmra.mxu0 %v329
    %v1250 = vpop.f32.mrf.mxu0
    %v1251 = vadd.f32 0.0, %v1250
    %v1252 = vpop.f32.mrf.mxu0
    %v1253 = vadd.f32 0.0, %v1252
    %1254 = vmatmul.bf16.gmra.mxu0 %v331
    %v1255 = vpop.f32.mrf.mxu0
    %v1256 = vadd.f32 0.0, %v1255
    %v1257 = vpop.f32.mrf.mxu0
    %v1258 = vadd.f32 0.0, %v1257
    %1259 = vdwg.mxu0
    %1260 = vmatpush.bf16.msra.mxu0 %v1170
    %1261 = vmatpush.bf16.msra.mxu0 %v1169
    %1262 = vmatpush.bf16.msra.mxu0 %v1168
    %1263 = vmatpush.bf16.msra.mxu0 %v1167
    %1264 = vmatpush.bf16.msra.mxu0 %v1166
    %1265 = vmatpush.bf16.msra.mxu0 %v1165
    %1266 = vmatpush.bf16.msra.mxu0 %v1164
    %1267 = vmatpush.bf16.msra.mxu0 %v1163
    %1268 = vmatmul.bf16.gmra.mxu0 %v302
    %v1269 = vpop.f32.mrf.mxu0
    %v1270 = vadd.f32 %v1181, %v1269
    %v1271 = vpop.f32.mrf.mxu0
    %v1272 = vadd.f32 %v1183, %v1271
    %1273 = vmatmul.bf16.gmra.mxu0 %v304
    %v1274 = vpop.f32.mrf.mxu0
    %v1275 = vadd.f32 %v1186, %v1274
    %v1276 = vpop.f32.mrf.mxu0
    %v1277 = vadd.f32 %v1188, %v1276
    %1278 = vmatmul.bf16.gmra.mxu0 %v306
    %v1279 = vpop.f32.mrf.mxu0
    %v1280 = vadd.f32 %v1191, %v1279
    %v1281 = vpop.f32.mrf.mxu0
    %v1282 = vadd.f32 %v1193, %v1281
    %1283 = vmatmul.bf16.gmra.mxu0 %v308
    %v1284 = vpop.f32.mrf.mxu0
    %v1285 = vadd.f32 %v1196, %v1284
    %v1286 = vpop.f32.mrf.mxu0
    %v1287 = vadd.f32 %v1198, %v1286
    %1288 = vmatmul.bf16.gmra.mxu0 %v310
    %v1289 = vpop.f32.mrf.mxu0
    %v1290 = vadd.f32 %v1201, %v1289
    %v1291 = vpop.f32.mrf.mxu0
    %v1292 = vadd.f32 %v1203, %v1291
    %1293 = vmatmul.bf16.gmra.mxu0 %v312
    %v1294 = vpop.f32.mrf.mxu0
    %v1295 = vadd.f32 %v1206, %v1294
    %v1296 = vpop.f32.mrf.mxu0
    %v1297 = vadd.f32 %v1208, %v1296
    %1298 = vmatmul.bf16.gmra.mxu0 %v314
    %v1299 = vpop.f32.mrf.mxu0
    %v1300 = vadd.f32 %v1211, %v1299
    %v1301 = vpop.f32.mrf.mxu0
    %v1302 = vadd.f32 %v1213, %v1301
    %1303 = vmatmul.bf16.gmra.mxu0 %v316
    %v1304 = vpop.f32.mrf.mxu0
    %v1305 = vadd.f32 %v1216, %v1304
    %v1306 = vpop.f32.mrf.mxu0
    %v1307 = vadd.f32 %v1218, %v1306
    %1308 = vmatmul.bf16.gmra.mxu0 %v318
    %v1309 = vpop.f32.mrf.mxu0
    %v1310 = vadd.f32 %v1221, %v1309
    %v1311 = vpop.f32.mrf.mxu0
    %v1312 = vadd.f32 %v1223, %v1311
    %1313 = vmatmul.bf16.gmra.mxu0 %v320
    %v1314 = vpop.f32.mrf.mxu0
    %v1315 = vadd.f32 %v1226, %v1314
    %v1316 = vpop.f32.mrf.mxu0
    %v1317 = vadd.f32 %v1228, %v1316
    %1318 = vmatmul.bf16.gmra.mxu0 %v322
    %v1319 = vpop.f32.mrf.mxu0
    %v1320 = vadd.f32 %v1231, %v1319
    %v1321 = vpop.f32.mrf.mxu0
    %v1322 = vadd.f32 %v1233, %v1321
    %1323 = vmatmul.bf16.gmra.mxu0 %v324
    %v1324 = vpop.f32.mrf.mxu0
    %v1325 = vadd.f32 %v1236, %v1324
    %v1326 = vpop.f32.mrf.mxu0
    %v1327 = vadd.f32 %v1238, %v1326
    %1328 = vmatmul.bf16.gmra.mxu0 %v326
    %v1329 = vpop.f32.mrf.mxu0
    %v1330 = vadd.f32 %v1241, %v1329
    %v1331 = vpop.f32.mrf.mxu0
    %v1332 = vadd.f32 %v1243, %v1331
    %1333 = vmatmul.bf16.gmra.mxu0 %v328
    %v1334 = vpop.f32.mrf.mxu0
    %v1335 = vadd.f32 %v1246, %v1334
    %v1336 = vpop.f32.mrf.mxu0
    %v1337 = vadd.f32 %v1248, %v1336
    %1338 = vmatmul.bf16.gmra.mxu0 %v330
    %v1339 = vpop.f32.mrf.mxu0
    %v1340 = vadd.f32 %v1251, %v1339
    %v1341 = vpop.f32.mrf.mxu0
    %v1342 = vadd.f32 %v1253, %v1341
    %1343 = vmatmul.bf16.gmra.mxu0 %v332
    %v1344 = vpop.f32.mrf.mxu0
    %v1345 = vadd.f32 %v1256, %v1344
    %v1346 = vpop.f32.mrf.mxu0
    %v1347 = vadd.f32 %v1258, %v1346
    %1348 = vdwg.mxu0
    %v1349 = vtanh.pop %v1270
    %v1350 = vtanh.pop %v1272
    %v1351 = vtanh.pop %v1275
    %v1352 = vtanh.pop %v1277
    %v1353 = vtanh.pop %v1280
    %v1354 = vtanh.pop %v1282
    %v1355 = vtanh.pop %v1285
    %v1356 = vtanh.pop %v1287
    %v1357 = vtanh.pop %v1290
    %v1358 = vtanh.pop %v1292
    %v1359 = vtanh.pop %v1295
    %v1360 = vtanh.pop %v1297
    %v1361 = vtanh.pop %v1300
    %v1362 = vtanh.pop %v1302
    %v1363 = vtanh.pop %v1305
    %v1364 = vtanh.pop %v1307
    %v1365 = vtanh.pop %v1310
    %v1366 = vtanh.pop %v1312
    %v1367 = vtanh.pop %v1315
    %v1368 = vtanh.pop %v1317
    %v1369 = vtanh.pop %v1320
    %v1370 = vtanh.pop %v1322
    %v1371 = vtanh.pop %v1325
    %v1372 = vtanh.pop %v1327
    %v1373 = vtanh.pop %v1330
    %v1374 = vtanh.pop %v1332
    %v1375 = vtanh.pop %v1335
    %v1376 = vtanh.pop %v1337
    %v1377 = vtanh.pop %v1340
    %v1378 = vtanh.pop %v1342
    %v1379 = vtanh.pop %v1345
    %v1380 = vtanh.pop %v1347
    %v1381 = vmul.f32 %v1349, %v578
    %v1382 = vmul.f32 %v1350, %v583
    %v1383 = vmul.f32 %v1351, %v588
    %v1384 = vmul.f32 %v1352, %v593
    %v1385 = vmul.f32 %v1353, %v598
    %v1386 = vmul.f32 %v1354, %v603
    %v1387 = vmul.f32 %v1355, %v608
    %v1388 = vmul.f32 %v1356, %v613
    %v1389 = vmul.f32 %v1357, %v618
    %v1390 = vmul.f32 %v1358, %v623
    %v1391 = vmul.f32 %v1359, %v628
    %v1392 = vmul.f32 %v1360, %v633
    %v1393 = vmul.f32 %v1361, %v638
    %v1394 = vmul.f32 %v1362, %v643
    %v1395 = vmul.f32 %v1363, %v648
    %v1396 = vmul.f32 %v1364, %v653
    %v1397 = vmul.f32 %v1365, %v658
    %v1398 = vmul.f32 %v1366, %v663
    %v1399 = vmul.f32 %v1367, %v668
    %v1400 = vmul.f32 %v1368, %v673
    %v1401 = vmul.f32 %v1369, %v678
    %v1402 = vmul.f32 %v1370, %v683
    %v1403 = vmul.f32 %v1371, %v688
    %v1404 = vmul.f32 %v1372, %v693
    %v1405 = vmul.f32 %v1373, %v698
    %v1406 = vmul.f32 %v1374, %v703
    %v1407 = vmul.f32 %v1375, %v708
    %v1408 = vmul.f32 %v1376, %v713
    %v1409 = vmul.f32 %v1377, %v718
    %v1410 = vmul.f32 %v1378, %v723
    %v1411 = vmul.f32 %v1379, %v728
    %v1412 = vmul.f32 %v1380, %v733
    %v1413 = vsel %vm767, %v1381, 0.0
    %v1414 = vsel %vm767, %v1382, 0.0
    %v1415 = vadd.f32 %v1413, %v1414
    %v1416 = vsel %vm767, %v1383, 0.0
    %v1417 = vadd.f32 %v1415, %v1416
    %v1418 = vsel %vm767, %v1384, 0.0
    %v1419 = vadd.f32 %v1417, %v1418
    %v1420 = vsel %vm767, %v1385, 0.0
    %v1421 = vadd.f32 %v1419, %v1420
    %v1422 = vsel %vm767, %v1386, 0.0
    %v1423 = vadd.f32 %v1421, %v1422
    %v1424 = vsel %vm767, %v1387, 0.0
    %v1425 = vadd.f32 %v1423, %v1424
    %v1426 = vsel %vm767, %v1388, 0.0
    %v1427 = vadd.f32 %v1425, %v1426
    %v1428 = vsel %vm767, %v1389, 0.0
    %v1429 = vadd.f32 %v1427, %v1428
    %v1430 = vsel %vm767, %v1390, 0.0
    %v1431 = vadd.f32 %v1429, %v1430
    %v1432 = vsel %vm767, %v1391, 0.0
    %v1433 = vadd.f32 %v1431, %v1432
    %v1434 = vsel %vm767, %v1392, 0.0
    %v1435 = vadd.f32 %v1433, %v1434
    %v1436 = vsel %vm767, %v1393, 0.0
    %v1437 = vadd.f32 %v1435, %v1436
    %v1438 = vsel %vm767, %v1394, 0.0
    %v1439 = vadd.f32 %v1437, %v1438
    %v1440 = vsel %vm767, %v1395, 0.0
    %v1441 = vadd.f32 %v1439, %v1440
    %v1442 = vsel %vm767, %v1396, 0.0
    %v1443 = vadd.f32 %v1441, %v1442
    %v1444 = vsel %vm767, %v1397, 0.0
    %v1445 = vadd.f32 %v1443, %v1444
    %v1446 = vsel %vm767, %v1398, 0.0
    %v1447 = vadd.f32 %v1445, %v1446
    %v1448 = vsel %vm767, %v1399, 0.0
    %v1449 = vadd.f32 %v1447, %v1448
    %v1450 = vsel %vm767, %v1400, 0.0
    %v1451 = vadd.f32 %v1449, %v1450
    %v1452 = vsel %vm767, %v1401, 0.0
    %v1453 = vadd.f32 %v1451, %v1452
    %v1454 = vsel %vm767, %v1402, 0.0
    %v1455 = vadd.f32 %v1453, %v1454
    %v1456 = vsel %vm767, %v1403, 0.0
    %v1457 = vadd.f32 %v1455, %v1456
    %v1458 = vsel %vm767, %v1404, 0.0
    %v1459 = vadd.f32 %v1457, %v1458
    %v1460 = vsel %vm767, %v1405, 0.0
    %v1461 = vadd.f32 %v1459, %v1460
    %v1462 = vsel %vm767, %v1406, 0.0
    %v1463 = vadd.f32 %v1461, %v1462
    %v1464 = vsel %vm767, %v1407, 0.0
    %v1465 = vadd.f32 %v1463, %v1464
    %v1466 = vsel %vm767, %v1408, 0.0
    %v1467 = vadd.f32 %v1465, %v1466
    %v1468 = vsel %vm767, %v1409, 0.0
    %v1469 = vadd.f32 %v1467, %v1468
    %v1470 = vsel %vm767, %v1410, 0.0
    %v1471 = vadd.f32 %v1469, %v1470
    %v1472 = vsel %vm767, %v1411, 0.0
    %v1473 = vadd.f32 %v1471, %v1472
    %v1474 = vsel %vm767, %v1412, 0.0
    %v1475 = vadd.f32 %v1473, %v1474
    %v1476 = vrot.slane %v1475, 4
    %v1477 = vadd.f32 %v1475, %v1476
    %v1478 = vrot.slane %v1477, 2
    %v1479 = vadd.f32 %v1477, %v1478
    %v1480 = vrot.slane %v1479, 1
    %v1481 = vadd.f32 %v1479, %v1480
    %v1482 = vld [vmem:[#allocation2 + $0x1] sm:$0x1]
    %v1483 = vsel %vm767, %v1481, -inf
    %1484 = vmax.xlane.f32.xlu0 %v1483
    %v1485 = vpop.xlane.xlu0 %1484
    %v1486 = vmax.f32 %v1482, %v1485
    %v1487 = vsub.f32 %v1482, %v1486
    %v1488 = vmul.f32 %v1487, 1.442695
    %v1489 = vpow.pop %v1488
    %1491 = vset.pattern.permute.xlu0 0
    %1492 = vperm.xlu0 %1491, %v1486
    %v1493 = vpop.permute.xlu0 %1492
    %v1495 = vsub.f32 %v1481, %v1493
    %v1496 = vmul.f32 %v1495, 1.442695
    %v1497 = vpow.pop %v1496
    %v1498 = vperm.slane %v1497, 0
    %v1499 = vmul.f32 %v1123, %v1498
    %v1500 = vmul.f32 %v1124, %v1498
    %v1501 = vmul.f32 %v1125, %v1498
    %v1502 = vmul.f32 %v1126, %v1498
    %v1503 = vmul.f32 %v1127, %v1498
    %v1504 = vmul.f32 %v1128, %v1498
    %v1505 = vmul.f32 %v1129, %v1498
    %v1506 = vmul.f32 %v1130, %v1498
    %v1507 = vmul.f32 %v1131, %v1498
    %v1508 = vmul.f32 %v1132, %v1498
    %v1509 = vmul.f32 %v1133, %v1498
    %v1510 = vmul.f32 %v1134, %v1498
    %v1511 = vmul.f32 %v1135, %v1498
    %v1512 = vmul.f32 %v1136, %v1498
    %v1513 = vmul.f32 %v1137, %v1498
    %v1514 = vmul.f32 %v1138, %v1498
    %v1515 = vmul.f32 %v1139, %v1498
    %v1516 = vmul.f32 %v1140, %v1498
    %v1517 = vmul.f32 %v1141, %v1498
    %v1518 = vmul.f32 %v1142, %v1498
    %v1519 = vmul.f32 %v1143, %v1498
    %v1520 = vmul.f32 %v1144, %v1498
    %v1521 = vmul.f32 %v1145, %v1498
    %v1522 = vmul.f32 %v1146, %v1498
    %v1523 = vmul.f32 %v1147, %v1498
    %v1524 = vmul.f32 %v1148, %v1498
    %v1525 = vmul.f32 %v1149, %v1498
    %v1526 = vmul.f32 %v1150, %v1498
    %v1527 = vmul.f32 %v1151, %v1498
    %v1528 = vmul.f32 %v1152, %v1498
    %v1529 = vmul.f32 %v1153, %v1498
    %v1530 = vmul.f32 %v1154, %v1498
    %v1531 = vsel %vm767, %v1499, 0.0
    %1532 = vadd.xlane.f32.xlu0 %v1531
    %v1533 = vpop.xlane.xlu0 %1532
    %v1534 = vsel %vm767, %v1500, 0.0
    %1535 = vadd.xlane.f32.xlu0 %v1534
    %v1536 = vpop.xlane.xlu0 %1535
    %v1537 = vsel %vm767, %v1501, 0.0
    %1538 = vadd.xlane.f32.xlu0 %v1537
    %v1539 = vpop.xlane.xlu0 %1538
    %v1540 = vsel %vm767, %v1502, 0.0
    %1541 = vadd.xlane.f32.xlu0 %v1540
    %v1542 = vpop.xlane.xlu0 %1541
    %v1543 = vsel %vm767, %v1503, 0.0
    %1544 = vadd.xlane.f32.xlu0 %v1543
    %v1545 = vpop.xlane.xlu0 %1544
    %v1546 = vsel %vm767, %v1504, 0.0
    %1547 = vadd.xlane.f32.xlu0 %v1546
    %v1548 = vpop.xlane.xlu0 %1547
    %v1549 = vsel %vm767, %v1505, 0.0
    %1550 = vadd.xlane.f32.xlu0 %v1549
    %v1551 = vpop.xlane.xlu0 %1550
    %v1552 = vsel %vm767, %v1506, 0.0
    %1553 = vadd.xlane.f32.xlu0 %v1552
    %v1554 = vpop.xlane.xlu0 %1553
    %v1555 = vsel %vm767, %v1507, 0.0
    %1556 = vadd.xlane.f32.xlu0 %v1555
    %v1557 = vpop.xlane.xlu0 %1556
    %v1558 = vsel %vm767, %v1508, 0.0
    %1559 = vadd.xlane.f32.xlu0 %v1558
    %v1560 = vpop.xlane.xlu0 %1559
    %v1561 = vsel %vm767, %v1509, 0.0
    %1562 = vadd.xlane.f32.xlu0 %v1561
    %v1563 = vpop.xlane.xlu0 %1562
    %v1564 = vsel %vm767, %v1510, 0.0
    %1565 = vadd.xlane.f32.xlu0 %v1564
    %v1566 = vpop.xlane.xlu0 %1565
    %v1567 = vsel %vm767, %v1511, 0.0
    %1568 = vadd.xlane.f32.xlu0 %v1567
    %v1569 = vpop.xlane.xlu0 %1568
    %v1570 = vsel %vm767, %v1512, 0.0
    %1571 = vadd.xlane.f32.xlu0 %v1570
    %v1572 = vpop.xlane.xlu0 %1571
    %v1573 = vsel %vm767, %v1513, 0.0
    %1574 = vadd.xlane.f32.xlu0 %v1573
    %v1575 = vpop.xlane.xlu0 %1574
    %v1576 = vsel %vm767, %v1514, 0.0
    %1577 = vadd.xlane.f32.xlu0 %v1576
    %v1578 = vpop.xlane.xlu0 %1577
    %v1579 = vsel %vm767, %v1515, 0.0
    %1580 = vadd.xlane.f32.xlu0 %v1579
    %v1581 = vpop.xlane.xlu0 %1580
    %v1582 = vsel %vm767, %v1516, 0.0
    %1583 = vadd.xlane.f32.xlu0 %v1582
    %v1584 = vpop.xlane.xlu0 %1583
    %v1585 = vsel %vm767, %v1517, 0.0
    %1586 = vadd.xlane.f32.xlu0 %v1585
    %v1587 = vpop.xlane.xlu0 %1586
    %v1588 = vsel %vm767, %v1518, 0.0
    %1589 = vadd.xlane.f32.xlu0 %v1588
    %v1590 = vpop.xlane.xlu0 %1589
    %v1591 = vsel %vm767, %v1519, 0.0
    %1592 = vadd.xlane.f32.xlu0 %v1591
    %v1593 = vpop.xlane.xlu0 %1592
    %v1594 = vsel %vm767, %v1520, 0.0
    %1595 = vadd.xlane.f32.xlu0 %v1594
    %v1596 = vpop.xlane.xlu0 %1595
    %v1597 = vsel %vm767, %v1521, 0.0
    %1598 = vadd.xlane.f32.xlu0 %v1597
    %v1599 = vpop.xlane.xlu0 %1598
    %v1600 = vsel %vm767, %v1522, 0.0
    %1601 = vadd.xlane.f32.xlu0 %v1600
    %v1602 = vpop.xlane.xlu0 %1601
    %v1603 = vsel %vm767, %v1523, 0.0
    %1604 = vadd.xlane.f32.xlu0 %v1603
    %v1605 = vpop.xlane.xlu0 %1604
    %v1606 = vsel %vm767, %v1524, 0.0
    %1607 = vadd.xlane.f32.xlu0 %v1606
    %v1608 = vpop.xlane.xlu0 %1607
    %v1609 = vsel %vm767, %v1525, 0.0
    %1610 = vadd.xlane.f32.xlu0 %v1609
    %v1611 = vpop.xlane.xlu0 %1610
    %v1612 = vsel %vm767, %v1526, 0.0
    %1613 = vadd.xlane.f32.xlu0 %v1612
    %v1614 = vpop.xlane.xlu0 %1613
    %v1615 = vsel %vm767, %v1527, 0.0
    %1616 = vadd.xlane.f32.xlu0 %v1615
    %v1617 = vpop.xlane.xlu0 %1616
    %v1618 = vsel %vm767, %v1528, 0.0
    %1619 = vadd.xlane.f32.xlu0 %v1618
    %v1620 = vpop.xlane.xlu0 %1619
    %v1621 = vsel %vm767, %v1529, 0.0
    %1622 = vadd.xlane.f32.xlu0 %v1621
    %v1623 = vpop.xlane.xlu0 %1622
    %v1624 = vsel %vm767, %v1530, 0.0
    %1625 = vadd.xlane.f32.xlu0 %v1624
    %v1626 = vpop.xlane.xlu0 %1625
    %v1627 = vld [vmem:[#allocation3 + $0x1] sm:$0x1]
    %v1628 = vmul.f32 %v1489, %v1627
    %v1629 = vsel %vm984, %v1497, 0.0
    %1630 = vadd.xlane.f32.xlu0 %v1629
    %v1631 = vpop.xlane.xlu0 %1630
    %v1632 = vadd.f32 %v1628, %v1631
    %1633 = vst.msk [vmem:[#allocation3 + $0x1] sm:$0x1] %vm989, %v1632
    %s1634 = scalar_lea.vmem [#allocation4], 256
    %v1635 = vld [vmem:[%s1634] sm:$0xff]
    %v1636 = vld [vmem:[%s1634 + $0x8] sm:$0xff]
    %v1637 = vld [vmem:[%s1634 + $0x10] sm:$0xff]
    %v1638 = vld [vmem:[%s1634 + $0x18] sm:$0xff]
    %v1639 = vld [vmem:[%s1634 + $0x20] sm:$0xff]
    %v1640 = vld [vmem:[%s1634 + $0x28] sm:$0xff]
    %v1641 = vld [vmem:[%s1634 + $0x30] sm:$0xff]
    %v1642 = vld [vmem:[%s1634 + $0x38] sm:$0xff]
    %v1643 = vld [vmem:[%s1634 + $0x40] sm:$0xff]
    %v1644 = vld [vmem:[%s1634 + $0x48] sm:$0xff]
    %v1645 = vld [vmem:[%s1634 + $0x50] sm:$0xff]
    %v1646 = vld [vmem:[%s1634 + $0x58] sm:$0xff]
    %v1647 = vld [vmem:[%s1634 + $0x60] sm:$0xff]
    %v1648 = vld [vmem:[%s1634 + $0x68] sm:$0xff]
    %v1649 = vld [vmem:[%s1634 + $0x70] sm:$0xff]
    %v1650 = vld [vmem:[%s1634 + $0x78] sm:$0xff]
    %v1651 = vld [vmem:[%s1634 + $0x80] sm:$0xff]
    %v1652 = vld [vmem:[%s1634 + $0x88] sm:$0xff]
    %v1653 = vld [vmem:[%s1634 + $0x90] sm:$0xff]
    %v1654 = vld [vmem:[%s1634 + $0x98] sm:$0xff]
    %v1655 = vld [vmem:[%s1634 + $0xa0] sm:$0xff]
    %v1656 = vld [vmem:[%s1634 + $0xa8] sm:$0xff]
    %v1657 = vld [vmem:[%s1634 + $0xb0] sm:$0xff]
    %v1658 = vld [vmem:[%s1634 + $0xb8] sm:$0xff]
    %v1659 = vld [vmem:[%s1634 + $0xc0] sm:$0xff]
    %v1660 = vld [vmem:[%s1634 + $0xc8] sm:$0xff]
    %v1661 = vld [vmem:[%s1634 + $0xd0] sm:$0xff]
    %v1662 = vld [vmem:[%s1634 + $0xd8] sm:$0xff]
    %v1663 = vld [vmem:[%s1634 + $0xe0] sm:$0xff]
    %v1664 = vld [vmem:[%s1634 + $0xe8] sm:$0xff]
    %v1665 = vld [vmem:[%s1634 + $0xf0] sm:$0xff]
    %v1666 = vld [vmem:[%s1634 + $0xf8] sm:$0xff]
    %v1667 = vperm.slane %v1489, 0
    %v1668 = vmul.f32 %v1667, %v1635
    %v1669 = vmul.f32 %v1667, %v1636
    %v1670 = vmul.f32 %v1667, %v1637
    %v1671 = vmul.f32 %v1667, %v1638
    %v1672 = vmul.f32 %v1667, %v1639
    %v1673 = vmul.f32 %v1667, %v1640
    %v1674 = vmul.f32 %v1667, %v1641
    %v1675 = vmul.f32 %v1667, %v1642
    %v1676 = vmul.f32 %v1667, %v1643
    %v1677 = vmul.f32 %v1667, %v1644
    %v1678 = vmul.f32 %v1667, %v1645
    %v1679 = vmul.f32 %v1667, %v1646
    %v1680 = vmul.f32 %v1667, %v1647
    %v1681 = vmul.f32 %v1667, %v1648
    %v1682 = vmul.f32 %v1667, %v1649
    %v1683 = vmul.f32 %v1667, %v1650
    %v1684 = vmul.f32 %v1667, %v1651
    %v1685 = vmul.f32 %v1667, %v1652
    %v1686 = vmul.f32 %v1667, %v1653
    %v1687 = vmul.f32 %v1667, %v1654
    %v1688 = vmul.f32 %v1667, %v1655
    %v1689 = vmul.f32 %v1667, %v1656
    %v1690 = vmul.f32 %v1667, %v1657
    %v1691 = vmul.f32 %v1667, %v1658
    %v1692 = vmul.f32 %v1667, %v1659
    %v1693 = vmul.f32 %v1667, %v1660
    %v1694 = vmul.f32 %v1667, %v1661
    %v1695 = vmul.f32 %v1667, %v1662
    %v1696 = vmul.f32 %v1667, %v1663
    %v1697 = vmul.f32 %v1667, %v1664
    %v1698 = vmul.f32 %v1667, %v1665
    %v1699 = vmul.f32 %v1667, %v1666
    %v1700 = vadd.f32 %v1668, %v1533
    %v1701 = vadd.f32 %v1669, %v1536
    %v1702 = vadd.f32 %v1670, %v1539
    %v1703 = vadd.f32 %v1671, %v1542
    %v1704 = vadd.f32 %v1672, %v1545
    %v1705 = vadd.f32 %v1673, %v1548
    %v1706 = vadd.f32 %v1674, %v1551
    %v1707 = vadd.f32 %v1675, %v1554
    %v1708 = vadd.f32 %v1676, %v1557
    %v1709 = vadd.f32 %v1677, %v1560
    %v1710 = vadd.f32 %v1678, %v1563
    %v1711 = vadd.f32 %v1679, %v1566
    %v1712 = vadd.f32 %v1680, %v1569
    %v1713 = vadd.f32 %v1681, %v1572
    %v1714 = vadd.f32 %v1682, %v1575
    %v1715 = vadd.f32 %v1683, %v1578
    %v1716 = vadd.f32 %v1684, %v1581
    %v1717 = vadd.f32 %v1685, %v1584
    %v1718 = vadd.f32 %v1686, %v1587
    %v1719 = vadd.f32 %v1687, %v1590
    %v1720 = vadd.f32 %v1688, %v1593
    %v1721 = vadd.f32 %v1689, %v1596
    %v1722 = vadd.f32 %v1690, %v1599
    %v1723 = vadd.f32 %v1691, %v1602
    %v1724 = vadd.f32 %v1692, %v1605
    %v1725 = vadd.f32 %v1693, %v1608
    %v1726 = vadd.f32 %v1694, %v1611
    %v1727 = vadd.f32 %v1695, %v1614
    %v1728 = vadd.f32 %v1696, %v1617
    %v1729 = vadd.f32 %v1697, %v1620
    %v1730 = vadd.f32 %v1698, %v1623
    %v1731 = vadd.f32 %v1699, %v1626
    %1732 = vst.msk [vmem:[%s1634] sm:$0xff] %vm1088, %v1700
    %1733 = vst.msk [vmem:[%s1634 + $0x8] sm:$0xff] %vm1088, %v1701
    %1734 = vst.msk [vmem:[%s1634 + $0x10] sm:$0xff] %vm1088, %v1702
    %1735 = vst.msk [vmem:[%s1634 + $0x18] sm:$0xff] %vm1088, %v1703
    %1736 = vst.msk [vmem:[%s1634 + $0x20] sm:$0xff] %vm1088, %v1704
    %1737 = vst.msk [vmem:[%s1634 + $0x28] sm:$0xff] %vm1088, %v1705
    %1738 = vst.msk [vmem:[%s1634 + $0x30] sm:$0xff] %vm1088, %v1706
    %1739 = vst.msk [vmem:[%s1634 + $0x38] sm:$0xff] %vm1088, %v1707
    %1740 = vst.msk [vmem:[%s1634 + $0x40] sm:$0xff] %vm1088, %v1708
    %1741 = vst.msk [vmem:[%s1634 + $0x48] sm:$0xff] %vm1088, %v1709
    %1742 = vst.msk [vmem:[%s1634 + $0x50] sm:$0xff] %vm1088, %v1710
    %1743 = vst.msk [vmem:[%s1634 + $0x58] sm:$0xff] %vm1088, %v1711
    %1744 = vst.msk [vmem:[%s1634 + $0x60] sm:$0xff] %vm1088, %v1712
    %1745 = vst.msk [vmem:[%s1634 + $0x68] sm:$0xff] %vm1088, %v1713
    %1746 = vst.msk [vmem:[%s1634 + $0x70] sm:$0xff] %vm1088, %v1714
    %1747 = vst.msk [vmem:[%s1634 + $0x78] sm:$0xff] %vm1088, %v1715
    %1748 = vst.msk [vmem:[%s1634 + $0x80] sm:$0xff] %vm1088, %v1716
    %1749 = vst.msk [vmem:[%s1634 + $0x88] sm:$0xff] %vm1088, %v1717
    %1750 = vst.msk [vmem:[%s1634 + $0x90] sm:$0xff] %vm1088, %v1718
    %1751 = vst.msk [vmem:[%s1634 + $0x98] sm:$0xff] %vm1088, %v1719
    %1752 = vst.msk [vmem:[%s1634 + $0xa0] sm:$0xff] %vm1088, %v1720
    %1753 = vst.msk [vmem:[%s1634 + $0xa8] sm:$0xff] %vm1088, %v1721
    %1754 = vst.msk [vmem:[%s1634 + $0xb0] sm:$0xff] %vm1088, %v1722
    %1755 = vst.msk [vmem:[%s1634 + $0xb8] sm:$0xff] %vm1088, %v1723
    %1756 = vst.msk [vmem:[%s1634 + $0xc0] sm:$0xff] %vm1088, %v1724
    %1757 = vst.msk [vmem:[%s1634 + $0xc8] sm:$0xff] %vm1088, %v1725
    %1758 = vst.msk [vmem:[%s1634 + $0xd0] sm:$0xff] %vm1088, %v1726
    %1759 = vst.msk [vmem:[%s1634 + $0xd8] sm:$0xff] %vm1088, %v1727
    %1760 = vst.msk [vmem:[%s1634 + $0xe0] sm:$0xff] %vm1088, %v1728
    %1761 = vst.msk [vmem:[%s1634 + $0xe8] sm:$0xff] %vm1088, %v1729
    %1762 = vst.msk [vmem:[%s1634 + $0xf0] sm:$0xff] %vm1088, %v1730
    %1763 = vst.msk [vmem:[%s1634 + $0xf8] sm:$0xff] %vm1088, %v1731
    %1764 = vst.msk [vmem:[#allocation2 + $0x1] sm:$0x1] %vm989, %v1486
    // Predicated region
    $region26: #{tpu_custom_call.1} parent=1 // pred_check
      %p1765 = pneg %p21
    $region27: #{tpu_custom_call.1} parent=1 // pred_check_branch
      %1767 = sbr.rel (%p1765) target = $region29
    $region28: #{tpu_custom_call.1} parent=1 // pred_region
      %v1768 = vld [vmem:[%s3] sm:$0xff]
      %v1769 = vld [vmem:[%s3 + $0x8] sm:$0xff]
      %v1770 = vld [vmem:[%s3 + $0x10] sm:$0xff]
      %v1771 = vld [vmem:[%s3 + $0x18] sm:$0xff]
      %v1772 = vld [vmem:[%s3 + $0x20] sm:$0xff]
      %v1773 = vld [vmem:[%s3 + $0x28] sm:$0xff]
      %v1774 = vld [vmem:[%s3 + $0x30] sm:$0xff]
      %v1775 = vld [vmem:[%s3 + $0x38] sm:$0xff]
      %v1776 = vld [vmem:[%s3 + $0x40] sm:$0xff]
      %v1777 = vld [vmem:[%s3 + $0x48] sm:$0xff]
      %v1778 = vld [vmem:[%s3 + $0x50] sm:$0xff]
      %v1779 = vld [vmem:[%s3 + $0x58] sm:$0xff]
      %v1780 = vld [vmem:[%s3 + $0x60] sm:$0xff]
      %v1781 = vld [vmem:[%s3 + $0x68] sm:$0xff]
      %v1782 = vld [vmem:[%s3 + $0x70] sm:$0xff]
      %v1783 = vld [vmem:[%s3 + $0x78] sm:$0xff]
      %v1784 = vld [vmem:[%s3 + $0x80] sm:$0xff]
      %v1785 = vld [vmem:[%s3 + $0x88] sm:$0xff]
      %v1786 = vld [vmem:[%s3 + $0x90] sm:$0xff]
      %v1787 = vld [vmem:[%s3 + $0x98] sm:$0xff]
      %v1788 = vld [vmem:[%s3 + $0xa0] sm:$0xff]
      %v1789 = vld [vmem:[%s3 + $0xa8] sm:$0xff]
      %v1790 = vld [vmem:[%s3 + $0xb0] sm:$0xff]
      %v1791 = vld [vmem:[%s3 + $0xb8] sm:$0xff]
      %v1792 = vld [vmem:[%s3 + $0xc0] sm:$0xff]
      %v1793 = vld [vmem:[%s3 + $0xc8] sm:$0xff]
      %v1794 = vld [vmem:[%s3 + $0xd0] sm:$0xff]
      %v1795 = vld [vmem:[%s3 + $0xd8] sm:$0xff]
      %v1796 = vld [vmem:[%s3 + $0xe0] sm:$0xff]
      %v1797 = vld [vmem:[%s3 + $0xe8] sm:$0xff]
      %v1798 = vld [vmem:[%s3 + $0xf0] sm:$0xff]
      %v1799 = vld [vmem:[%s3 + $0xf8] sm:$0xff]
      %v1800 = vld [vmem:[%s4] sm:$0x1]
      %v1801 = vld [vmem:[#allocation3] sm:$0x1]
      %v1802 = vrcp.pop %v1801
      %v1803 = vld [vmem:[#allocation4] sm:$0xff]
      %v1804 = vld [vmem:[#allocation4 + $0x8] sm:$0xff]
      %v1805 = vld [vmem:[#allocation4 + $0x10] sm:$0xff]
      %v1806 = vld [vmem:[#allocation4 + $0x18] sm:$0xff]
      %v1807 = vld [vmem:[#allocation4 + $0x20] sm:$0xff]
      %v1808 = vld [vmem:[#allocation4 + $0x28] sm:$0xff]
      %v1809 = vld [vmem:[#allocation4 + $0x30] sm:$0xff]
      %v1810 = vld [vmem:[#allocation4 + $0x38] sm:$0xff]
      %v1811 = vld [vmem:[#allocation4 + $0x40] sm:$0xff]
      %v1812 = vld [vmem:[#allocation4 + $0x48] sm:$0xff]
      %v1813 = vld [vmem:[#allocation4 + $0x50] sm:$0xff]
      %v1814 = vld [vmem:[#allocation4 + $0x58] sm:$0xff]
      %v1815 = vld [vmem:[#allocation4 + $0x60] sm:$0xff]
      %v1816 = vld [vmem:[#allocation4 + $0x68] sm:$0xff]
      %v1817 = vld [vmem:[#allocation4 + $0x70] sm:$0xff]
      %v1818 = vld [vmem:[#allocation4 + $0x78] sm:$0xff]
      %v1819 = vld [vmem:[#allocation4 + $0x80] sm:$0xff]
      %v1820 = vld [vmem:[#allocation4 + $0x88] sm:$0xff]
      %v1821 = vld [vmem:[#allocation4 + $0x90] sm:$0xff]
      %v1822 = vld [vmem:[#allocation4 + $0x98] sm:$0xff]
      %v1823 = vld [vmem:[#allocation4 + $0xa0] sm:$0xff]
      %v1824 = vld [vmem:[#allocation4 + $0xa8] sm:$0xff]
      %v1825 = vld [vmem:[#allocation4 + $0xb0] sm:$0xff]
      %v1826 = vld [vmem:[#allocation4 + $0xb8] sm:$0xff]
      %v1827 = vld [vmem:[#allocation4 + $0xc0] sm:$0xff]
      %v1828 = vld [vmem:[#allocation4 + $0xc8] sm:$0xff]
      %v1829 = vld [vmem:[#allocation4 + $0xd0] sm:$0xff]
      %v1830 = vld [vmem:[#allocation4 + $0xd8] sm:$0xff]
      %v1831 = vld [vmem:[#allocation4 + $0xe0] sm:$0xff]
      %v1832 = vld [vmem:[#allocation4 + $0xe8] sm:$0xff]
      %v1833 = vld [vmem:[#allocation4 + $0xf0] sm:$0xff]
      %v1834 = vld [vmem:[#allocation4 + $0xf8] sm:$0xff]
      %v1835 = vperm.slane %v1802, 0
      %v1836 = vmul.f32 %v1803, %v1835
      %v1837 = vmul.f32 %v1804, %v1835
      %v1838 = vmul.f32 %v1805, %v1835
      %v1839 = vmul.f32 %v1806, %v1835
      %v1840 = vmul.f32 %v1807, %v1835
      %v1841 = vmul.f32 %v1808, %v1835
      %v1842 = vmul.f32 %v1809, %v1835
      %v1843 = vmul.f32 %v1810, %v1835
      %v1844 = vmul.f32 %v1811, %v1835
      %v1845 = vmul.f32 %v1812, %v1835
      %v1846 = vmul.f32 %v1813, %v1835
      %v1847 = vmul.f32 %v1814, %v1835
      %v1848 = vmul.f32 %v1815, %v1835
      %v1849 = vmul.f32 %v1816, %v1835
      %v1850 = vmul.f32 %v1817, %v1835
      %v1851 = vmul.f32 %v1818, %v1835
      %v1852 = vmul.f32 %v1819, %v1835
      %v1853 = vmul.f32 %v1820, %v1835
      %v1854 = vmul.f32 %v1821, %v1835
      %v1855 = vmul.f32 %v1822, %v1835
      %v1856 = vmul.f32 %v1823, %v1835
      %v1857 = vmul.f32 %v1824, %v1835
      %v1858 = vmul.f32 %v1825, %v1835
      %v1859 = vmul.f32 %v1826, %v1835
      %v1860 = vmul.f32 %v1827, %v1835
      %v1861 = vmul.f32 %v1828, %v1835
      %v1862 = vmul.f32 %v1829, %v1835
      %v1863 = vmul.f32 %v1830, %v1835
      %v1864 = vmul.f32 %v1831, %v1835
      %v1865 = vmul.f32 %v1832, %v1835
      %v1866 = vmul.f32 %v1833, %v1835
      %v1867 = vmul.f32 %v1834, %v1835
      %1869 = vset.pattern.permute.xlu0 0
      %1870 = vperm.xlu0 %1869, %v1836
      %v1871 = vpop.permute.xlu0 %1870
      %1874 = vset.pattern.permute.xlu0 0
      %1875 = vperm.xlu0 %1874, %v1837
      %v1876 = vpop.permute.xlu0 %1875
      %1879 = vset.pattern.permute.xlu0 0
      %1880 = vperm.xlu0 %1879, %v1838
      %v1881 = vpop.permute.xlu0 %1880
      %1884 = vset.pattern.permute.xlu0 0
      %1885 = vperm.xlu0 %1884, %v1839
      %v1886 = vpop.permute.xlu0 %1885
      %1889 = vset.pattern.permute.xlu0 0
      %1890 = vperm.xlu0 %1889, %v1840
      %v1891 = vpop.permute.xlu0 %1890
      %1894 = vset.pattern.permute.xlu0 0
      %1895 = vperm.xlu0 %1894, %v1841
      %v1896 = vpop.permute.xlu0 %1895
      %1899 = vset.pattern.permute.xlu0 0
      %1900 = vperm.xlu0 %1899, %v1842
      %v1901 = vpop.permute.xlu0 %1900
      %1904 = vset.pattern.permute.xlu0 0
      %1905 = vperm.xlu0 %1904, %v1843
      %v1906 = vpop.permute.xlu0 %1905
      %1909 = vset.pattern.permute.xlu0 0
      %1910 = vperm.xlu0 %1909, %v1844
      %v1911 = vpop.permute.xlu0 %1910
      %1914 = vset.pattern.permute.xlu0 0
      %1915 = vperm.xlu0 %1914, %v1845
      %v1916 = vpop.permute.xlu0 %1915
      %1919 = vset.pattern.permute.xlu0 0
      %1920 = vperm.xlu0 %1919, %v1846
      %v1921 = vpop.permute.xlu0 %1920
      %1924 = vset.pattern.permute.xlu0 0
      %1925 = vperm.xlu0 %1924, %v1847
      %v1926 = vpop.permute.xlu0 %1925
      %1929 = vset.pattern.permute.xlu0 0
      %1930 = vperm.xlu0 %1929, %v1848
      %v1931 = vpop.permute.xlu0 %1930
      %1934 = vset.pattern.permute.xlu0 0
      %1935 = vperm.xlu0 %1934, %v1849
      %v1936 = vpop.permute.xlu0 %1935
      %1939 = vset.pattern.permute.xlu0 0
      %1940 = vperm.xlu0 %1939, %v1850
      %v1941 = vpop.permute.xlu0 %1940
      %1944 = vset.pattern.permute.xlu0 0
      %1945 = vperm.xlu0 %1944, %v1851
      %v1946 = vpop.permute.xlu0 %1945
      %1949 = vset.pattern.permute.xlu0 0
      %1950 = vperm.xlu0 %1949, %v1852
      %v1951 = vpop.permute.xlu0 %1950
      %1954 = vset.pattern.permute.xlu0 0
      %1955 = vperm.xlu0 %1954, %v1853
      %v1956 = vpop.permute.xlu0 %1955
      %1959 = vset.pattern.permute.xlu0 0
      %1960 = vperm.xlu0 %1959, %v1854
      %v1961 = vpop.permute.xlu0 %1960
      %1964 = vset.pattern.permute.xlu0 0
      %1965 = vperm.xlu0 %1964, %v1855
      %v1966 = vpop.permute.xlu0 %1965
      %1969 = vset.pattern.permute.xlu0 0
      %1970 = vperm.xlu0 %1969, %v1856
      %v1971 = vpop.permute.xlu0 %1970
      %1974 = vset.pattern.permute.xlu0 0
      %1975 = vperm.xlu0 %1974, %v1857
      %v1976 = vpop.permute.xlu0 %1975
      %1979 = vset.pattern.permute.xlu0 0
      %1980 = vperm.xlu0 %1979, %v1858
      %v1981 = vpop.permute.xlu0 %1980
      %1984 = vset.pattern.permute.xlu0 0
      %1985 = vperm.xlu0 %1984, %v1859
      %v1986 = vpop.permute.xlu0 %1985
      %1989 = vset.pattern.permute.xlu0 0
      %1990 = vperm.xlu0 %1989, %v1860
      %v1991 = vpop.permute.xlu0 %1990
      %1994 = vset.pattern.permute.xlu0 0
      %1995 = vperm.xlu0 %1994, %v1861
      %v1996 = vpop.permute.xlu0 %1995
      %1999 = vset.pattern.permute.xlu0 0
      %2000 = vperm.xlu0 %1999, %v1862
      %v2001 = vpop.permute.xlu0 %2000
      %2004 = vset.pattern.permute.xlu0 0
      %2005 = vperm.xlu0 %2004, %v1863
      %v2006 = vpop.permute.xlu0 %2005
      %2009 = vset.pattern.permute.xlu0 0
      %2010 = vperm.xlu0 %2009, %v1864
      %v2011 = vpop.permute.xlu0 %2010
      %2014 = vset.pattern.permute.xlu0 0
      %2015 = vperm.xlu0 %2014, %v1865
      %v2016 = vpop.permute.xlu0 %2015
      %2019 = vset.pattern.permute.xlu0 0
      %2020 = vperm.xlu0 %2019, %v1866
      %v2021 = vpop.permute.xlu0 %2020
      %2024 = vset.pattern.permute.xlu0 0
      %2025 = vperm.xlu0 %2024, %v1867
      %v2026 = vpop.permute.xlu0 %2025
      %v2028 = vmul.f32 %v1871, %v1768
      %v2029 = vmul.f32 %v1876, %v1769
      %v2030 = vmul.f32 %v1881, %v1770
      %v2031 = vmul.f32 %v1886, %v1771
      %v2032 = vmul.f32 %v1891, %v1772
      %v2033 = vmul.f32 %v1896, %v1773
      %v2034 = vmul.f32 %v1901, %v1774
      %v2035 = vmul.f32 %v1906, %v1775
      %v2036 = vmul.f32 %v1911, %v1776
      %v2037 = vmul.f32 %v1916, %v1777
      %v2038 = vmul.f32 %v1921, %v1778
      %v2039 = vmul.f32 %v1926, %v1779
      %v2040 = vmul.f32 %v1931, %v1780
      %v2041 = vmul.f32 %v1936, %v1781
      %v2042 = vmul.f32 %v1941, %v1782
      %v2043 = vmul.f32 %v1946, %v1783
      %v2044 = vmul.f32 %v1951, %v1784
      %v2045 = vmul.f32 %v1956, %v1785
      %v2046 = vmul.f32 %v1961, %v1786
      %v2047 = vmul.f32 %v1966, %v1787
      %v2048 = vmul.f32 %v1971, %v1788
      %v2049 = vmul.f32 %v1976, %v1789
      %v2050 = vmul.f32 %v1981, %v1790
      %v2051 = vmul.f32 %v1986, %v1791
      %v2052 = vmul.f32 %v1991, %v1792
      %v2053 = vmul.f32 %v1996, %v1793
      %v2054 = vmul.f32 %v2001, %v1794
      %v2055 = vmul.f32 %v2006, %v1795
      %v2056 = vmul.f32 %v2011, %v1796
      %v2057 = vmul.f32 %v2016, %v1797
      %v2058 = vmul.f32 %v2021, %v1798
      %v2059 = vmul.f32 %v2026, %v1799
      %vm2060 = vcmask 39936
      %v2061 = vsel %vm2060, %v2028, 0.0
      %v2062 = vsel %vm2060, %v2029, 0.0
      %v2063 = vadd.f32 %v2061, %v2062
      %v2064 = vsel %vm2060, %v2030, 0.0
      %v2065 = vadd.f32 %v2063, %v2064
      %v2066 = vsel %vm2060, %v2031, 0.0
      %v2067 = vadd.f32 %v2065, %v2066
      %v2068 = vsel %vm2060, %v2032, 0.0
      %v2069 = vadd.f32 %v2067, %v2068
      %v2070 = vsel %vm2060, %v2033, 0.0
      %v2071 = vadd.f32 %v2069, %v2070
      %v2072 = vsel %vm2060, %v2034, 0.0
      %v2073 = vadd.f32 %v2071, %v2072
      %v2074 = vsel %vm2060, %v2035, 0.0
      %v2075 = vadd.f32 %v2073, %v2074
      %v2076 = vsel %vm2060, %v2036, 0.0
      %v2077 = vadd.f32 %v2075, %v2076
      %v2078 = vsel %vm2060, %v2037, 0.0
      %v2079 = vadd.f32 %v2077, %v2078
      %v2080 = vsel %vm2060, %v2038, 0.0
      %v2081 = vadd.f32 %v2079, %v2080
      %v2082 = vsel %vm2060, %v2039, 0.0
      %v2083 = vadd.f32 %v2081, %v2082
      %v2084 = vsel %vm2060, %v2040, 0.0
      %v2085 = vadd.f32 %v2083, %v2084
      %v2086 = vsel %vm2060, %v2041, 0.0
      %v2087 = vadd.f32 %v2085, %v2086
      %v2088 = vsel %vm2060, %v2042, 0.0
      %v2089 = vadd.f32 %v2087, %v2088
      %v2090 = vsel %vm2060, %v2043, 0.0
      %v2091 = vadd.f32 %v2089, %v2090
      %v2092 = vsel %vm2060, %v2044, 0.0
      %v2093 = vadd.f32 %v2091, %v2092
      %v2094 = vsel %vm2060, %v2045, 0.0
      %v2095 = vadd.f32 %v2093, %v2094
      %v2096 = vsel %vm2060, %v2046, 0.0
      %v2097 = vadd.f32 %v2095, %v2096
      %v2098 = vsel %vm2060, %v2047, 0.0
      %v2099 = vadd.f32 %v2097, %v2098
      %v2100 = vsel %vm2060, %v2048, 0.0
      %v2101 = vadd.f32 %v2099, %v2100
      %v2102 = vsel %vm2060, %v2049, 0.0
      %v2103 = vadd.f32 %v2101, %v2102
      %v2104 = vsel %vm2060, %v2050, 0.0
      %v2105 = vadd.f32 %v2103, %v2104
      %v2106 = vsel %vm2060, %v2051, 0.0
      %v2107 = vadd.f32 %v2105, %v2106
      %v2108 = vsel %vm2060, %v2052, 0.0
      %v2109 = vadd.f32 %v2107, %v2108
      %v2110 = vsel %vm2060, %v2053, 0.0
      %v2111 = vadd.f32 %v2109, %v2110
      %v2112 = vsel %vm2060, %v2054, 0.0
      %v2113 = vadd.f32 %v2111, %v2112
      %v2114 = vsel %vm2060, %v2055, 0.0
      %v2115 = vadd.f32 %v2113, %v2114
      %v2116 = vsel %vm2060, %v2056, 0.0
      %v2117 = vadd.f32 %v2115, %v2116
      %v2118 = vsel %vm2060, %v2057, 0.0
      %v2119 = vadd.f32 %v2117, %v2118
      %v2120 = vsel %vm2060, %v2058, 0.0
      %v2121 = vadd.f32 %v2119, %v2120
      %v2122 = vsel %vm2060, %v2059, 0.0
      %v2123 = vadd.f32 %v2121, %v2122
      %v2124 = vrot.slane %v2123, 4
      %v2125 = vadd.f32 %v2123, %v2124
      %v2126 = vrot.slane %v2125, 2
      %v2127 = vadd.f32 %v2125, %v2126
      %v2128 = vrot.slane %v2127, 1
      %v2129 = vadd.f32 %v2127, %v2128
      %v2130 = vadd.f32 %v2129, %v1800
      %vm2131 = vcmask 32768
      %2132 = vst.msk [vmem:[#allocation5] sm:$0x1] %vm2131, %v2130
      %v2133 = vld [vmem:[#allocation3 + $0x1] sm:$0x1]
      %v2134 = vrcp.pop %v2133
      %v2135 = vld [vmem:[%s1634] sm:$0xff]
      %v2136 = vld [vmem:[%s1634 + $0x8] sm:$0xff]
      %v2137 = vld [vmem:[%s1634 + $0x10] sm:$0xff]
      %v2138 = vld [vmem:[%s1634 + $0x18] sm:$0xff]
      %v2139 = vld [vmem:[%s1634 + $0x20] sm:$0xff]
      %v2140 = vld [vmem:[%s1634 + $0x28] sm:$0xff]
      %v2141 = vld [vmem:[%s1634 + $0x30] sm:$0xff]
      %v2142 = vld [vmem:[%s1634 + $0x38] sm:$0xff]
      %v2143 = vld [vmem:[%s1634 + $0x40] sm:$0xff]
      %v2144 = vld [vmem:[%s1634 + $0x48] sm:$0xff]
      %v2145 = vld [vmem:[%s1634 + $0x50] sm:$0xff]
      %v2146 = vld [vmem:[%s1634 + $0x58] sm:$0xff]
      %v2147 = vld [vmem:[%s1634 + $0x60] sm:$0xff]
      %v2148 = vld [vmem:[%s1634 + $0x68] sm:$0xff]
      %v2149 = vld [vmem:[%s1634 + $0x70] sm:$0xff]
      %v2150 = vld [vmem:[%s1634 + $0x78] sm:$0xff]
      %v2151 = vld [vmem:[%s1634 + $0x80] sm:$0xff]
      %v2152 = vld [vmem:[%s1634 + $0x88] sm:$0xff]
      %v2153 = vld [vmem:[%s1634 + $0x90] sm:$0xff]
      %v2154 = vld [vmem:[%s1634 + $0x98] sm:$0xff]
      %v2155 = vld [vmem:[%s1634 + $0xa0] sm:$0xff]
      %v2156 = vld [vmem:[%s1634 + $0xa8] sm:$0xff]
      %v2157 = vld [vmem:[%s1634 + $0xb0] sm:$0xff]
      %v2158 = vld [vmem:[%s1634 + $0xb8] sm:$0xff]
      %v2159 = vld [vmem:[%s1634 + $0xc0] sm:$0xff]
      %v2160 = vld [vmem:[%s1634 + $0xc8] sm:$0xff]
      %v2161 = vld [vmem:[%s1634 + $0xd0] sm:$0xff]
      %v2162 = vld [vmem:[%s1634 + $0xd8] sm:$0xff]
      %v2163 = vld [vmem:[%s1634 + $0xe0] sm:$0xff]
      %v2164 = vld [vmem:[%s1634 + $0xe8] sm:$0xff]
      %v2165 = vld [vmem:[%s1634 + $0xf0] sm:$0xff]
      %v2166 = vld [vmem:[%s1634 + $0xf8] sm:$0xff]
      %v2167 = vperm.slane %v2134, 0
      %v2168 = vmul.f32 %v2135, %v2167
      %v2169 = vmul.f32 %v2136, %v2167
      %v2170 = vmul.f32 %v2137, %v2167
      %v2171 = vmul.f32 %v2138, %v2167
      %v2172 = vmul.f32 %v2139, %v2167
      %v2173 = vmul.f32 %v2140, %v2167
      %v2174 = vmul.f32 %v2141, %v2167
      %v2175 = vmul.f32 %v2142, %v2167
      %v2176 = vmul.f32 %v2143, %v2167
      %v2177 = vmul.f32 %v2144, %v2167
      %v2178 = vmul.f32 %v2145, %v2167
      %v2179 = vmul.f32 %v2146, %v2167
      %v2180 = vmul.f32 %v2147, %v2167
      %v2181 = vmul.f32 %v2148, %v2167
      %v2182 = vmul.f32 %v2149, %v2167
      %v2183 = vmul.f32 %v2150, %v2167
      %v2184 = vmul.f32 %v2151, %v2167
      %v2185 = vmul.f32 %v2152, %v2167
      %v2186 = vmul.f32 %v2153, %v2167
      %v2187 = vmul.f32 %v2154, %v2167
      %v2188 = vmul.f32 %v2155, %v2167
      %v2189 = vmul.f32 %v2156, %v2167
      %v2190 = vmul.f32 %v2157, %v2167
      %v2191 = vmul.f32 %v2158, %v2167
      %v2192 = vmul.f32 %v2159, %v2167
      %v2193 = vmul.f32 %v2160, %v2167
      %v2194 = vmul.f32 %v2161, %v2167
      %v2195 = vmul.f32 %v2162, %v2167
      %v2196 = vmul.f32 %v2163, %v2167
      %v2197 = vmul.f32 %v2164, %v2167
      %v2198 = vmul.f32 %v2165, %v2167
      %v2199 = vmul.f32 %v2166, %v2167
      %2201 = vset.pattern.permute.xlu0 0
      %2202 = vperm.xlu0 %2201, %v2168
      %v2203 = vpop.permute.xlu0 %2202
      %2206 = vset.pattern.permute.xlu0 0
      %2207 = vperm.xlu0 %2206, %v2169
      %v2208 = vpop.permute.xlu0 %2207
      %2211 = vset.pattern.permute.xlu0 0
      %2212 = vperm.xlu0 %2211, %v2170
      %v2213 = vpop.permute.xlu0 %2212
      %2216 = vset.pattern.permute.xlu0 0
      %2217 = vperm.xlu0 %2216, %v2171
      %v2218 = vpop.permute.xlu0 %2217
      %2221 = vset.pattern.permute.xlu0 0
      %2222 = vperm.xlu0 %2221, %v2172
      %v2223 = vpop.permute.xlu0 %2222
      %2226 = vset.pattern.permute.xlu0 0
      %2227 = vperm.xlu0 %2226, %v2173
      %v2228 = vpop.permute.xlu0 %2227
      %2231 = vset.pattern.permute.xlu0 0
      %2232 = vperm.xlu0 %2231, %v2174
      %v2233 = vpop.permute.xlu0 %2232
      %2236 = vset.pattern.permute.xlu0 0
      %2237 = vperm.xlu0 %2236, %v2175
      %v2238 = vpop.permute.xlu0 %2237
      %2241 = vset.pattern.permute.xlu0 0
      %2242 = vperm.xlu0 %2241, %v2176
      %v2243 = vpop.permute.xlu0 %2242
      %2246 = vset.pattern.permute.xlu0 0
      %2247 = vperm.xlu0 %2246, %v2177
      %v2248 = vpop.permute.xlu0 %2247
      %2251 = vset.pattern.permute.xlu0 0
      %2252 = vperm.xlu0 %2251, %v2178
      %v2253 = vpop.permute.xlu0 %2252
      %2256 = vset.pattern.permute.xlu0 0
      %2257 = vperm.xlu0 %2256, %v2179
      %v2258 = vpop.permute.xlu0 %2257
      %2261 = vset.pattern.permute.xlu0 0
      %2262 = vperm.xlu0 %2261, %v2180
      %v2263 = vpop.permute.xlu0 %2262
      %2266 = vset.pattern.permute.xlu0 0
      %2267 = vperm.xlu0 %2266, %v2181
      %v2268 = vpop.permute.xlu0 %2267
      %2271 = vset.pattern.permute.xlu0 0
      %2272 = vperm.xlu0 %2271, %v2182
      %v2273 = vpop.permute.xlu0 %2272
      %2276 = vset.pattern.permute.xlu0 0
      %2277 = vperm.xlu0 %2276, %v2183
      %v2278 = vpop.permute.xlu0 %2277
      %2281 = vset.pattern.permute.xlu0 0
      %2282 = vperm.xlu0 %2281, %v2184
      %v2283 = vpop.permute.xlu0 %2282
      %2286 = vset.pattern.permute.xlu0 0
      %2287 = vperm.xlu0 %2286, %v2185
      %v2288 = vpop.permute.xlu0 %2287
      %2291 = vset.pattern.permute.xlu0 0
      %2292 = vperm.xlu0 %2291, %v2186
      %v2293 = vpop.permute.xlu0 %2292
      %2296 = vset.pattern.permute.xlu0 0
      %2297 = vperm.xlu0 %2296, %v2187
      %v2298 = vpop.permute.xlu0 %2297
      %2301 = vset.pattern.permute.xlu0 0
      %2302 = vperm.xlu0 %2301, %v2188
      %v2303 = vpop.permute.xlu0 %2302
      %2306 = vset.pattern.permute.xlu0 0
      %2307 = vperm.xlu0 %2306, %v2189
      %v2308 = vpop.permute.xlu0 %2307
      %2311 = vset.pattern.permute.xlu0 0
      %2312 = vperm.xlu0 %2311, %v2190
      %v2313 = vpop.permute.xlu0 %2312
      %2316 = vset.pattern.permute.xlu0 0
      %2317 = vperm.xlu0 %2316, %v2191
      %v2318 = vpop.permute.xlu0 %2317
      %2321 = vset.pattern.permute.xlu0 0
      %2322 = vperm.xlu0 %2321, %v2192
      %v2323 = vpop.permute.xlu0 %2322
      %2326 = vset.pattern.permute.xlu0 0
      %2327 = vperm.xlu0 %2326, %v2193
      %v2328 = vpop.permute.xlu0 %2327
      %2331 = vset.pattern.permute.xlu0 0
      %2332 = vperm.xlu0 %2331, %v2194
      %v2333 = vpop.permute.xlu0 %2332
      %2336 = vset.pattern.permute.xlu0 0
      %2337 = vperm.xlu0 %2336, %v2195
      %v2338 = vpop.permute.xlu0 %2337
      %2341 = vset.pattern.permute.xlu0 0
      %2342 = vperm.xlu0 %2341, %v2196
      %v2343 = vpop.permute.xlu0 %2342
      %2346 = vset.pattern.permute.xlu0 0
      %2347 = vperm.xlu0 %2346, %v2197
      %v2348 = vpop.permute.xlu0 %2347
      %2351 = vset.pattern.permute.xlu0 0
      %2352 = vperm.xlu0 %2351, %v2198
      %v2353 = vpop.permute.xlu0 %2352
      %2356 = vset.pattern.permute.xlu0 0
      %2357 = vperm.xlu0 %2356, %v2199
      %v2358 = vpop.permute.xlu0 %2357
      %v2360 = vmul.f32 %v2203, %v1768
      %v2361 = vmul.f32 %v2208, %v1769
      %v2362 = vmul.f32 %v2213, %v1770
      %v2363 = vmul.f32 %v2218, %v1771
      %v2364 = vmul.f32 %v2223, %v1772
      %v2365 = vmul.f32 %v2228, %v1773
      %v2366 = vmul.f32 %v2233, %v1774
      %v2367 = vmul.f32 %v2238, %v1775
      %v2368 = vmul.f32 %v2243, %v1776
      %v2369 = vmul.f32 %v2248, %v1777
      %v2370 = vmul.f32 %v2253, %v1778
      %v2371 = vmul.f32 %v2258, %v1779
      %v2372 = vmul.f32 %v2263, %v1780
      %v2373 = vmul.f32 %v2268, %v1781
      %v2374 = vmul.f32 %v2273, %v1782
      %v2375 = vmul.f32 %v2278, %v1783
      %v2376 = vmul.f32 %v2283, %v1784
      %v2377 = vmul.f32 %v2288, %v1785
      %v2378 = vmul.f32 %v2293, %v1786
      %v2379 = vmul.f32 %v2298, %v1787
      %v2380 = vmul.f32 %v2303, %v1788
      %v2381 = vmul.f32 %v2308, %v1789
      %v2382 = vmul.f32 %v2313, %v1790
      %v2383 = vmul.f32 %v2318, %v1791
      %v2384 = vmul.f32 %v2323, %v1792
      %v2385 = vmul.f32 %v2328, %v1793
      %v2386 = vmul.f32 %v2333, %v1794
      %v2387 = vmul.f32 %v2338, %v1795
      %v2388 = vmul.f32 %v2343, %v1796
      %v2389 = vmul.f32 %v2348, %v1797
      %v2390 = vmul.f32 %v2353, %v1798
      %v2391 = vmul.f32 %v2358, %v1799
      %v2392 = vsel %vm2060, %v2360, 0.0
      %v2393 = vsel %vm2060, %v2361, 0.0
      %v2394 = vadd.f32 %v2392, %v2393
      %v2395 = vsel %vm2060, %v2362, 0.0
      %v2396 = vadd.f32 %v2394, %v2395
      %v2397 = vsel %vm2060, %v2363, 0.0
      %v2398 = vadd.f32 %v2396, %v2397
      %v2399 = vsel %vm2060, %v2364, 0.0
      %v2400 = vadd.f32 %v2398, %v2399
      %v2401 = vsel %vm2060, %v2365, 0.0
      %v2402 = vadd.f32 %v2400, %v2401
      %v2403 = vsel %vm2060, %v2366, 0.0
      %v2404 = vadd.f32 %v2402, %v2403
      %v2405 = vsel %vm2060, %v2367, 0.0
      %v2406 = vadd.f32 %v2404, %v2405
      %v2407 = vsel %vm2060, %v2368, 0.0
      %v2408 = vadd.f32 %v2406, %v2407
      %v2409 = vsel %vm2060, %v2369, 0.0
      %v2410 = vadd.f32 %v2408, %v2409
      %v2411 = vsel %vm2060, %v2370, 0.0
      %v2412 = vadd.f32 %v2410, %v2411
      %v2413 = vsel %vm2060, %v2371, 0.0
      %v2414 = vadd.f32 %v2412, %v2413
      %v2415 = vsel %vm2060, %v2372, 0.0
      %v2416 = vadd.f32 %v2414, %v2415
      %v2417 = vsel %vm2060, %v2373, 0.0
      %v2418 = vadd.f32 %v2416, %v2417
      %v2419 = vsel %vm2060, %v2374, 0.0
      %v2420 = vadd.f32 %v2418, %v2419
      %v2421 = vsel %vm2060, %v2375, 0.0
      %v2422 = vadd.f32 %v2420, %v2421
      %v2423 = vsel %vm2060, %v2376, 0.0
      %v2424 = vadd.f32 %v2422, %v2423
      %v2425 = vsel %vm2060, %v2377, 0.0
      %v2426 = vadd.f32 %v2424, %v2425
      %v2427 = vsel %vm2060, %v2378, 0.0
      %v2428 = vadd.f32 %v2426, %v2427
      %v2429 = vsel %vm2060, %v2379, 0.0
      %v2430 = vadd.f32 %v2428, %v2429
      %v2431 = vsel %vm2060, %v2380, 0.0
      %v2432 = vadd.f32 %v2430, %v2431
      %v2433 = vsel %vm2060, %v2381, 0.0
      %v2434 = vadd.f32 %v2432, %v2433
      %v2435 = vsel %vm2060, %v2382, 0.0
      %v2436 = vadd.f32 %v2434, %v2435
      %v2437 = vsel %vm2060, %v2383, 0.0
      %v2438 = vadd.f32 %v2436, %v2437
      %v2439 = vsel %vm2060, %v2384, 0.0
      %v2440 = vadd.f32 %v2438, %v2439
      %v2441 = vsel %vm2060, %v2385, 0.0
      %v2442 = vadd.f32 %v2440, %v2441
      %v2443 = vsel %vm2060, %v2386, 0.0
      %v2444 = vadd.f32 %v2442, %v2443
      %v2445 = vsel %vm2060, %v2387, 0.0
      %v2446 = vadd.f32 %v2444, %v2445
      %v2447 = vsel %vm2060, %v2388, 0.0
      %v2448 = vadd.f32 %v2446, %v2447
      %v2449 = vsel %vm2060, %v2389, 0.0
      %v2450 = vadd.f32 %v2448, %v2449
      %v2451 = vsel %vm2060, %v2390, 0.0
      %v2452 = vadd.f32 %v2450, %v2451
      %v2453 = vsel %vm2060, %v2391, 0.0
      %v2454 = vadd.f32 %v2452, %v2453
      %v2455 = vrot.slane %v2454, 4
      %v2456 = vadd.f32 %v2454, %v2455
      %v2457 = vrot.slane %v2456, 2
      %v2458 = vadd.f32 %v2456, %v2457
      %v2459 = vrot.slane %v2458, 1
      %v2460 = vadd.f32 %v2458, %v2459
      %v2461 = vadd.f32 %v2460, %v1800
      %s2462 = scalar_lea.vmem [#allocation5], 1
      %2463 = vst.msk [vmem:[%s2462] sm:$0x1] %vm2131, %v2461
    $region29: #{tpu_custom_call.1} parent=1 // pred_fallthru
      _
    // Predicated region
    $region30: #{tpu_custom_call.1} parent=1 // pred_check
      _
    $region31: #{tpu_custom_call.1} parent=1 // pred_check_branch
      %2465 = sbr.rel (0) target = $region33
    $region32: #{tpu_custom_call.1} parent=1 // pred_region
      %2467 = vsyncadd [#allocation6], 0
      %s2468 = sshll.u32 [#allocation5], 4
      %s2469 = int_to_ptr.vmem [resolvable:$true] %s2468
      %s2470 = sshll.u32 %s5, 4
      %s2471 = int_to_ptr.hbm [resolvable:$true] %s2470
      %2476 = dma.vmem_to_hbm [thread:$0]  %s2469, 32, %s2471, [#allocation6], 16, 16, 1
    $region33: #{tpu_custom_call.1} parent=1 // pred_fallthru
      _
    // Predicated region
    $region34: #{tpu_custom_call.1} parent=1 // pred_check
      _
    $region35: #{tpu_custom_call.1} parent=1 // pred_check_branch
      %2478 = sbr.rel (0) target = $region37
    $region36: #{tpu_custom_call.1} parent=1 // pred_region
      %2480 = dma.done [#allocation6], 32
    $region37: #{tpu_custom_call.1} parent=1 // pred_fallthru
      _
    %2481 = vsyncpa [#allocation6], 1

</llo_original>
